<compile_context>
chip_gen: v5e
topology: v5e:2x2
jax: 0.10.0
libtpu: 0.0.40
codegen_flags: <defaults>
</compile_context>

<pallas_src>
import jax
import jax.numpy as jnp
from jax.experimental import pallas as pl
from jax.experimental.pallas import tpu as pltpu

BN_EPS = 1e-5


def _cdiv(a, b):
    return -(-a // b)


def mlp_kernel(x_ref, w1_ref, prm_ref, cst_ref, o_ref, acc_ref):
    """One hidden tile: z = relu(x@W1+b1); BN batch stats; fold h1*w2 lane-dense."""
    k = pl.program_id(0)

    @pl.when(k == 0)
    def _():
        acc_ref[...] = jnp.zeros_like(acc_ref)

    b1 = prm_ref[0:1, :]          # (1, tile_h) f32
    g2 = prm_ref[1:2, :]          # gamma * w2_row, (1, tile_h) f32

    # ---- layer1 tile + ReLU: bf16 streams, f32 MXU accumulation -------------
    z = jnp.dot(x_ref[...], w1_ref[...], preferred_element_type=jnp.float32)
    z = jnp.maximum(z + b1, 0.0)                              # (B, tile_h) f32

    # ---- BatchNorm1d training-mode batch stats on the (idle) MXU ------------
    # r @ z replicates the batch mean on every row (no sublane/XLU reduces);
    # centered two-pass variance avoids E[z^2]-mean^2 cancellation.
    b = z.shape[0]
    r = jnp.full((b, b), 1.0 / b, dtype=jnp.float32)
    mean = jnp.dot(r, z, preferred_element_type=jnp.float32,
                   precision=jax.lax.Precision.HIGHEST)
    zm = z - mean
    var = jnp.dot(r, zm * zm, preferred_element_type=jnp.float32,
                  precision=jax.lax.Precision.HIGHEST)
    w = jax.lax.rsqrt(var + BN_EPS) * g2                      # inv_std*gamma*w2

    # ---- layer2 partial: fold 128-lane slices into the (B,128) accumulator --
    # (lane-dense VPU FMAs; no 1-column MXU matmul, no per-step masked stores)
    n_fold = zm.shape[1] // 128
    part = zm[:, 0:128] * w[:, 0:128]
    for q in range(1, n_fold):
        sl = slice(q * 128, (q + 1) * 128)
        part = part + zm[:, sl] * w[:, sl]
    acc_ref[...] += part

    # ---- last step: lane reduce + (b2 + sum(beta*w2)) + ReLU, one (B,1) store
    @pl.when(k == pl.num_programs(0) - 1)
    def _():
        y = jnp.sum(acc_ref[...], axis=-1, keepdims=True) + cst_ref[...]
        o_ref[...] = jnp.maximum(y, 0.0)


def _choose_tile_h(batch, p, h, *, vmem_budget_bytes=16 << 20, max_tile_h=32768):
    """Padding-minimal hidden tile (multiple of 128) within a VMEM byte budget."""
    # Per hidden column: double-buffered bf16 W1 + double-buffered (2,.) f32
    # params + ~6 live f32 (B,.) temporaries inside the body.
    bytes_per_col = 2 * p * 2 + 2 * 2 * 4 + 6 * batch * 4
    t = min(vmem_budget_bytes // max(bytes_per_col, 1), max_tile_h)
    t = max(128, (t // 128) * 128)
    n_tiles = _cdiv(h, t)
    tile_h = _cdiv(_cdiv(h, n_tiles), 128) * 128   # minimal padding for n_tiles
    return int(tile_h), int(n_tiles)


def prepack_mlp_params(w1, b1, gamma, beta, w2, b2, *, batch=8, tile_h=None,
                       weights_dtype=jnp.bfloat16):
    """One-time weight packing (do NOT call per forward).

    w1:(P,H)=layer1.weight.T  b1:(H,)  gamma/beta:(H,)=BN affine
    w2:(H,1)=layer2.weight.T  b2:(1,)
    """
    w1 = jnp.asarray(w1)
    p, h = w1.shape
    if tile_h is None:
        tile_h, n_tiles = _choose_tile_h(batch, p, h)
    else:
        assert tile_h % 128 == 0
        n_tiles = _cdiv(h, tile_h)
    pad = n_tiles * tile_h - h

    w2_row = jnp.asarray(w2).reshape(h).astype(jnp.float32)
    b1_row = jnp.asarray(b1).reshape(1, h).astype(jnp.float32)
    g2_row = (jnp.asarray(gamma).reshape(h).astype(jnp.float32) * w2_row).reshape(1, h)

    # Zero-padded columns: z = relu(0 + 0) = 0 and g2 = 0, so they contribute
    # exactly zero (rsqrt(eps) is finite and multiplied by g2 = 0).
    w1_p = jnp.pad(w1, ((0, 0), (0, pad))).astype(weights_dtype)
    params = jnp.pad(jnp.concatenate([b1_row, g2_row], axis=0),
                     ((0, 0), (0, pad))).astype(jnp.float32)          # (2, H_pad)
    const = (jnp.asarray(b2).reshape(()).astype(jnp.float32)
             + jnp.sum(jnp.asarray(beta).reshape(h).astype(jnp.float32) * w2_row)
             ).reshape(1, 1).astype(jnp.float32)
    return dict(w1=w1_p, params=params, const=const,
                tile_h=int(tile_h), n_tiles=int(n_tiles), p=int(p), h=int(h))


def mlp_forward_packed(x, packed):
    """Hot path: x:(B,P) f32 -> (B,1) f32 using prepacked weights."""
    bsz, p = x.shape
    assert p == packed["p"]
    tile_h, n_tiles = packed["tile_h"], packed["n_tiles"]
    w1_p, params, const = packed["w1"], packed["params"], packed["const"]
    x_q = x.astype(w1_p.dtype)

    return pl.pallas_call(
        mlp_kernel,
        out_shape=jax.ShapeDtypeStruct((bsz, 1), jnp.float32),
        grid_spec=pltpu.PrefetchScalarGridSpec(
            num_scalar_prefetch=0,
            grid=(n_tiles,),
            in_specs=[
                # x: tiny, resident (same block every step)
                pl.BlockSpec((bsz, p), lambda k: (0, 0)),
                # W1 hidden tile (the dominant HBM stream)
                pl.BlockSpec((p, tile_h), lambda k: (0, k)),
                # stacked [b1; gamma*w2] tile -> one small DMA per step
                pl.BlockSpec((2, tile_h), lambda k: (0, k)),
                # scalar constant b2 + sum(beta*w2), resident
                pl.BlockSpec((1, 1), lambda k: (0, 0)),
            ],
            out_specs=pl.BlockSpec((bsz, 1), lambda k: (0, 0)),
            scratch_shapes=[pltpu.VMEM((bsz, 128), jnp.float32)],
        ),
        compiler_params=pltpu.CompilerParams(
            dimension_semantics=("arbitrary",),
            vmem_limit_bytes=32 * 1024 * 1024,
        ),
    )(x_q, w1_p, params, const)


def mlp_forward(x, w1, b1, gamma, beta, w2, b2, **prepack_kwargs):
    """One-shot convenience wrapper (prepacks every call; prefer prepacking once)."""
    packed = prepack_mlp_params(w1, b1, gamma, beta, w2, b2,
                                batch=x.shape[0], **prepack_kwargs)
    return mlp_forward_packed(x, packed)


def reference_forward(x, w1, b1, gamma, beta, w2, b2):
    hp = jax.lax.Precision.HIGHEST
    z = jnp.maximum(jnp.dot(x, w1, precision=hp) + b1[None, :], 0.0)
    mean = jnp.mean(z, axis=0, keepdims=True)
    var = jnp.mean((z - mean) ** 2, axis=0, keepdims=True)
    h1 = (z - mean) * jax.lax.rsqrt(var + BN_EPS) * gamma[None, :] + beta[None, :]
    return jnp.maximum(jnp.dot(h1, w2, precision=hp) + b2[None, :], 0.0)


if __name__ == "__main__":
    # Small demo shapes consistent with the module (the real module uses
    # hidden=100000; H=500 is deliberately NOT a multiple of 128 to exercise
    # the padded-tail path).
    B, P, H = 8, 32, 500

    key = jax.random.PRNGKey(0)
    kx, kw1, kb1, kw2, kb2, kg, kbt = jax.random.split(key, 7)

    x = jax.random.normal(kx, (B, P), dtype=jnp.float32)

    # nn.Linear-style init: U(-1/sqrt(fan_in), 1/sqrt(fan_in))
    lim1 = 1.0 / (P ** 0.5)
    w1 = jax.random.uniform(kw1, (P, H), jnp.float32, -lim1, lim1)   # layer1.weight.T
    b1 = jax.random.uniform(kb1, (H,), jnp.float32, -lim1, lim1)
    lim2 = 1.0 / (H ** 0.5)
    w2 = jax.random.uniform(kw2, (H, 1), jnp.float32, -lim2, lim2)   # layer2.weight.T
    b2 = jax.random.uniform(kb2, (1,), jnp.float32, -lim2, lim2)

    # Non-default BN affine params to properly exercise gamma/beta handling.
    gamma = 1.0 + 0.1 * jax.random.normal(kg, (H,), jnp.float32)
    beta = 0.1 * jax.random.normal(kbt, (H,), jnp.float32)

    # One-time prepack (pad + bf16 cast + param folding), then the hot call.
    packed = prepack_mlp_params(w1, b1, gamma, beta, w2, b2, batch=B)
    out = mlp_forward_packed(x, packed)
    out = jax.block_until_ready(out)

    # The kernel deliberately streams x / W1 as bf16 (f32 accumulation);
    # compare against the reference on identically quantized x / W1.
    x_q = x.astype(jnp.bfloat16).astype(jnp.float32)
    w1_q = w1.astype(jnp.bfloat16).astype(jnp.float32)
    ref = reference_forward(x_q, w1_q, b1, gamma, beta, w2, b2)

    assert out.shape == (B, 1)
    assert jnp.allclose(out, ref, rtol=2e-3, atol=2e-3), "mismatch vs reference"

    print("KERNEL_OK")
</pallas_src>

<mosaic_0001>
module attributes {stable_mosaic.version = 11 : i64} {
  func.func @mlp_kernel(%arg0: i32, %arg1: memref<8x32xbf16, #tpu.memory_space<vmem>>, %arg2: memref<32x512xbf16, #tpu.memory_space<vmem>>, %arg3: memref<2x512xf32, #tpu.memory_space<vmem>>, %arg4: memref<1x1xf32, #tpu.memory_space<vmem>>, %arg5: memref<8x1xf32, #tpu.memory_space<vmem>>, %arg6: memref<8x128xf32, #tpu.memory_space<vmem>>) attributes {dimension_semantics = [#tpu.dimension_semantics<arbitrary>], iteration_bounds = array<i64: 1>, scalar_prefetch = 0 : i64, scratch_operands = 1 : i64, tpu.core_type = #tpu.core_type<tc>, window_params = [{pipeline_mode = #tpu.pipeline_mode<synchronous>, transform_indices = @transform_0, window_bounds = array<i64: 8, 32>}, {transform_indices = @transform_1, window_bounds = array<i64: 32, 512>}, {transform_indices = @transform_2, window_bounds = array<i64: 2, 512>}, {pipeline_mode = #tpu.pipeline_mode<synchronous>, transform_indices = @transform_3, window_bounds = array<i64: 1, 1>}, {pipeline_mode = #tpu.pipeline_mode<synchronous>, transform_indices = @transform_4, window_bounds = array<i64: 8, 1>}]} {
    %c0_i32 = arith.constant 0 : i32
    %0 = arith.cmpi eq, %arg0, %c0_i32 : i32
    %1 = arith.extui %0 : i1 to i32
    %c0_i32_0 = arith.constant 0 : i32
    %2 = arith.cmpi ne, %1, %c0_i32_0 : i32
    scf.if %2 {
      %cst_18 = arith.constant 0.000000e+00 : f32
      %43 = vector.broadcast %cst_18 : f32 to vector<8x128xf32>
      %c0_19 = arith.constant 0 : index
      %c0_20 = arith.constant 0 : index
      %44 = vector.load %arg6[%c0_19, %c0_20] : memref<8x128xf32, #tpu.memory_space<vmem>>, vector<8x128xf32>
      tpu.vector_store %arg6[%c0_19, %c0_20], %43 {strides = array<i32>} : memref<8x128xf32, #tpu.memory_space<vmem>>, vector<8x128xf32>,
    } else {
    }
    %c0 = arith.constant 0 : index
    %c0_1 = arith.constant 0 : index
    %3 = vector.load %arg3[%c0, %c0_1] : memref<2x512xf32, #tpu.memory_space<vmem>>, vector<1x512xf32>
    %c1 = arith.constant 1 : index
    %c0_2 = arith.constant 0 : index
    %4 = vector.load %arg3[%c1, %c0_2] : memref<2x512xf32, #tpu.memory_space<vmem>>, vector<1x512xf32>
    %c0_3 = arith.constant 0 : index
    %c0_4 = arith.constant 0 : index
    %5 = vector.load %arg1[%c0_3, %c0_4] : memref<8x32xbf16, #tpu.memory_space<vmem>>, vector<8x32xbf16>
    %c0_5 = arith.constant 0 : index
    %c0_6 = arith.constant 0 : index
    %6 = vector.load %arg2[%c0_5, %c0_6] : memref<32x512xbf16, #tpu.memory_space<vmem>>, vector<32x512xbf16>
    %cst = arith.constant dense<0.000000e+00> : vector<8x512xf32>
    %7 = tpu.matmul %5, %6, %cst {dimension_numbers = #tpu.dot_dimension_numbers<[1], [0], [0], [1], [0, 0, 1, 1], [], []>} : vector<8x32xbf16>, vector<32x512xbf16>, vector<8x512xf32> -> vector<8x512xf32>
    %8 = vector.broadcast %3 : vector<1x512xf32> to vector<8x512xf32>
    %9 = arith.addf %7, %8 : vector<8x512xf32>
    %cst_7 = arith.constant 0.000000e+00 : f32
    %10 = vector.broadcast %cst_7 : f32 to vector<8x512xf32>
    %11 = arith.maximumf %9, %10 : vector<8x512xf32>
    %cst_8 = arith.constant 1.250000e-01 : f32
    %12 = vector.broadcast %cst_8 : f32 to vector<8x8xf32>
    %cst_9 = arith.constant dense<0.000000e+00> : vector<8x512xf32>
    %13 = tpu.matmul %12, %11, %cst_9 {dimension_numbers = #tpu.dot_dimension_numbers<[1], [0], [0], [1], [0, 0, 1, 1], [], []>, precision = #tpu.contract_precision<fp32>} : vector<8x8xf32>, vector<8x512xf32>, vector<8x512xf32> -> vector<8x512xf32>
    %14 = arith.subf %11, %13 : vector<8x512xf32>
    %15 = arith.mulf %14, %14 : vector<8x512xf32>
    %cst_10 = arith.constant dense<0.000000e+00> : vector<8x512xf32>
    %16 = tpu.matmul %12, %15, %cst_10 {dimension_numbers = #tpu.dot_dimension_numbers<[1], [0], [0], [1], [0, 0, 1, 1], [], []>, precision = #tpu.contract_precision<fp32>} : vector<8x8xf32>, vector<8x512xf32>, vector<8x512xf32> -> vector<8x512xf32>
    %cst_11 = arith.constant 9.99999974E-6 : f32
    %17 = vector.broadcast %cst_11 : f32 to vector<8x512xf32>
    %18 = arith.addf %16, %17 : vector<8x512xf32>
    %19 = math.rsqrt %18 : vector<8x512xf32>
    %20 = vector.broadcast %4 : vector<1x512xf32> to vector<8x512xf32>
    %21 = arith.mulf %19, %20 : vector<8x512xf32>
    %22 = vector.extract_strided_slice %14 {offsets = [0, 0], sizes = [8, 128], strides = [1, 1]} : vector<8x512xf32> to vector<8x128xf32>
    %23 = vector.extract_strided_slice %21 {offsets = [0, 0], sizes = [8, 128], strides = [1, 1]} : vector<8x512xf32> to vector<8x128xf32>
    %24 = arith.mulf %22, %23 : vector<8x128xf32>
    %25 = vector.extract_strided_slice %14 {offsets = [0, 128], sizes = [8, 128], strides = [1, 1]} : vector<8x512xf32> to vector<8x128xf32>
    %26 = vector.extract_strided_slice %21 {offsets = [0, 128], sizes = [8, 128], strides = [1, 1]} : vector<8x512xf32> to vector<8x128xf32>
    %27 = arith.mulf %25, %26 : vector<8x128xf32>
    %28 = arith.addf %24, %27 : vector<8x128xf32>
    %29 = vector.extract_strided_slice %14 {offsets = [0, 256], sizes = [8, 128], strides = [1, 1]} : vector<8x512xf32> to vector<8x128xf32>
    %30 = vector.extract_strided_slice %21 {offsets = [0, 256], sizes = [8, 128], strides = [1, 1]} : vector<8x512xf32> to vector<8x128xf32>
    %31 = arith.mulf %29, %30 : vector<8x128xf32>
    %32 = arith.addf %28, %31 : vector<8x128xf32>
    %33 = vector.extract_strided_slice %14 {offsets = [0, 384], sizes = [8, 128], strides = [1, 1]} : vector<8x512xf32> to vector<8x128xf32>
    %34 = vector.extract_strided_slice %21 {offsets = [0, 384], sizes = [8, 128], strides = [1, 1]} : vector<8x512xf32> to vector<8x128xf32>
    %35 = arith.mulf %33, %34 : vector<8x128xf32>
    %36 = arith.addf %32, %35 : vector<8x128xf32>
    %c0_12 = arith.constant 0 : index
    %c0_13 = arith.constant 0 : index
    %37 = vector.load %arg6[%c0_12, %c0_13] : memref<8x128xf32, #tpu.memory_space<vmem>>, vector<8x128xf32>
    %38 = arith.addf %37, %36 : vector<8x128xf32>
    %c0_14 = arith.constant 0 : index
    %c0_15 = arith.constant 0 : index
    %39 = vector.load %arg6[%c0_14, %c0_15] : memref<8x128xf32, #tpu.memory_space<vmem>>, vector<8x128xf32>
    tpu.vector_store %arg6[%c0_14, %c0_15], %38 {strides = array<i32>} : memref<8x128xf32, #tpu.memory_space<vmem>>, vector<8x128xf32>,
    %c0_i32_16 = arith.constant 0 : i32
    %40 = arith.cmpi eq, %arg0, %c0_i32_16 : i32
    %41 = arith.extui %40 : i1 to i32
    %c0_i32_17 = arith.constant 0 : i32
    %42 = arith.cmpi ne, %41, %c0_i32_17 : i32
    scf.if %42 {
      %c0_18 = arith.constant 0 : index
      %c0_19 = arith.constant 0 : index
      %43 = vector.load %arg6[%c0_18, %c0_19] : memref<8x128xf32, #tpu.memory_space<vmem>>, vector<8x128xf32>
      %cst_20 = arith.constant dense<0.000000e+00> : vector<8xf32>
      %44 = vector.multi_reduction <add>, %43, %cst_20 [1] : vector<8x128xf32> to vector<8xf32>
      %45 = vector.shape_cast %44 : vector<8xf32> to vector<8x1xf32>
      %c0_21 = arith.constant 0 : index
      %c0_22 = arith.constant 0 : index
      %46 = vector.load %arg4[%c0_21, %c0_22] : memref<1x1xf32, #tpu.memory_space<vmem>>, vector<1x1xf32>
      %47 = vector.broadcast %46 : vector<1x1xf32> to vector<8x1xf32>
      %48 = arith.addf %45, %47 : vector<8x1xf32>
      %cst_23 = arith.constant 0.000000e+00 : f32
      %49 = vector.broadcast %cst_23 : f32 to vector<8x1xf32>
      %50 = arith.maximumf %48, %49 : vector<8x1xf32>
      %c0_24 = arith.constant 0 : index
      %c0_25 = arith.constant 0 : index
      %51 = vector.load %arg5[%c0_24, %c0_25] : memref<8x1xf32, #tpu.memory_space<vmem>>, vector<8x1xf32>
      tpu.vector_store %arg5[%c0_24, %c0_25], %50 {strides = array<i32>} : memref<8x1xf32, #tpu.memory_space<vmem>>, vector<8x1xf32>,
    } else {
    }
    return
  }
  func.func @transform_0(%arg0: i32) -> (i32, i32) {
    %c0_i32 = arith.constant 0 : i32
    %c0_i32_0 = arith.constant 0 : i32
    %c0_i32_1 = arith.constant 0 : i32
    return %c0_i32, %c0_i32_0 : i32, i32
  }
  func.func @transform_1(%arg0: i32) -> (i32, i32) {
    %c0_i32 = arith.constant 0 : i32
    %c0_i32_0 = arith.constant 0 : i32
    return %c0_i32, %arg0 : i32, i32
  }
  func.func @transform_2(%arg0: i32) -> (i32, i32) {
    %c0_i32 = arith.constant 0 : i32
    %c0_i32_0 = arith.constant 0 : i32
    return %c0_i32, %arg0 : i32, i32
  }
  func.func @transform_3(%arg0: i32) -> (i32, i32) {
    %c0_i32 = arith.constant 0 : i32
    %c0_i32_0 = arith.constant 0 : i32
    %c0_i32_1 = arith.constant 0 : i32
    return %c0_i32, %c0_i32_0 : i32, i32
  }
  func.func @transform_4(%arg0: i32) -> (i32, i32) {
    %c0_i32 = arith.constant 0 : i32
    %c0_i32_0 = arith.constant 0 : i32
    %c0_i32_1 = arith.constant 0 : i32
    return %c0_i32, %c0_i32_0 : i32, i32
  }
}

</mosaic_0001>

<llo_original>
// kernel: tpu_custom_call.1
$region0: #{tpu_custom_call.1}
  #allocation0 [shape = 'u32[]', space=smem, size = 0x4, offset = 0x4, fixed_abs, tag = 'smem constant byte address 0x4 - core index']
  #allocation1 [shape = 'u32[72,128]{1,0:T(1,128)}', space=vmem, size = 0x9000, scoped, tag = 'internal scratch']
  #allocation2 [shape = 'f32[8,128]{1,0:T(8,128)}', space=vmem, size = 0x1000, scoped, tag = 'scratch operand']
  #allocation3 [shape = 'f32[1,1]{1,0:T(1,128)S(1)}', space=vmem, size = 0x200, scoped, tag = 'scoped memory for tpu_custom_call.1']
  %s0 = inlined_call_operand.hbm [shape: bf16[8,32], index: 0, kind: input, shape index: {}]
  %s1 = inlined_call_operand.hbm [shape: bf16[32,512], index: 1, kind: input, shape index: {}]
  %s2 = inlined_call_operand.hbm [shape: f32[2,512], index: 2, kind: input, shape index: {}]
  %s3 = inlined_call_operand.<no memory space> [shape: f32[1,1], index: 3, kind: input, shape index: {}]
  %s4 = inlined_call_operand.vmem [shape: f32[8,1], index: 4, kind: output, shape index: {}]
  %s5 = sld [smem:[#allocation0]]
  $region46: #{tpu_custom_call.1} parent=0
    _
  %s7 = ssub.s32 1, %s5
  %s8 = scalar_select 0, %s7, %s5
  %v9 = vstv %s3
  %10 = vst [vmem:[#allocation3] sm:$0x1] %v9
  $region1: #{tpu_custom_call.1} parent=0
    #allocation4 [shape = 'u8[2048]{0}', space=vmem, size = 0x800, scoped, tag = 'input window, operand 0, single buffered']
    #allocation5 [shape = 's32[1]{0}', space=sflag, size = 0x4, scoped, tag = 'scoped memory for tpu_custom_call.1']
    #allocation6 [shape = 'u8[32768]{0}', space=vmem, size = 0x8000, scoped, tag = 'input window, operand 1, single buffered']
    #allocation7 [shape = 's32[1]{0}', space=sflag, size = 0x4, scoped, tag = 'scoped memory for tpu_custom_call.1']
    #allocation8 [shape = 'u8[4096]{0}', space=vmem, size = 0x1000, scoped, tag = 'input window, operand 2, single buffered']
    %11 = vsyncpa [#allocation5], 0
    %12 = vsyncpa [#allocation7], 0
    // Predicated region
    $region2: #{tpu_custom_call.1} parent=1 // pred_check
      _
    $region3: #{tpu_custom_call.1} parent=1 // pred_check_branch
      %14 = sbr.rel (0) target = $region5
    $region4: #{tpu_custom_call.1} parent=1 // pred_region
      %16 = vsyncadd [#allocation5], 0
      %s18 = sshll.u32 %s0, 4
      %s19 = int_to_ptr.hbm [resolvable:$true] %s18
      %s20 = sshll.u32 [#allocation4], 4
      %s21 = int_to_ptr.vmem [resolvable:$true] %s20
      %23 = dma.hbm_to_vmem [thread:$0]  %s19, 64, %s21, [#allocation5]
    $region5: #{tpu_custom_call.1} parent=1 // pred_fallthru
      _
    // Predicated region
    $region6: #{tpu_custom_call.1} parent=1 // pred_check
      _
    $region7: #{tpu_custom_call.1} parent=1 // pred_check_branch
      %25 = sbr.rel (0) target = $region9
    $region8: #{tpu_custom_call.1} parent=1 // pred_region
      %27 = vsyncadd [#allocation7], 0
      %s28 = sshll.u32 %s1, 4
      %s29 = int_to_ptr.hbm [resolvable:$true] %s28
      %s30 = sshll.u32 [#allocation6], 4
      %s31 = int_to_ptr.vmem [resolvable:$true] %s30
      %36 = dma.hbm_to_vmem [thread:$0]  %s29, 1024, %s31, [#allocation7], 256, 256, 16
    $region9: #{tpu_custom_call.1} parent=1 // pred_fallthru
      _
    // Predicated region
    $region10: #{tpu_custom_call.1} parent=1 // pred_check
      _
    $region11: #{tpu_custom_call.1} parent=1 // pred_check_branch
      %38 = sbr.rel (0) target = $region13
    $region12: #{tpu_custom_call.1} parent=1 // pred_region
      %40 = vsyncadd [#allocation7], 0
      %s42 = sshll.u32 %s2, 4
      %s43 = int_to_ptr.hbm [resolvable:$true] %s42
      %s44 = sshll.u32 [#allocation8], 4
      %s45 = int_to_ptr.vmem [resolvable:$true] %s44
      %47 = dma.hbm_to_vmem [thread:$0]  %s43, 128, %s45, [#allocation7]
    $region13: #{tpu_custom_call.1} parent=1 // pred_fallthru
      _
    // Predicated region
    $region14: #{tpu_custom_call.1} parent=1 // pred_check
      _
    $region15: #{tpu_custom_call.1} parent=1 // pred_check_branch
      %49 = sbr.rel (0) target = $region17
    $region16: #{tpu_custom_call.1} parent=1 // pred_region
      _
    $region17: #{tpu_custom_call.1} parent=1 // pred_fallthru
      _
    // Predicated region
    $region18: #{tpu_custom_call.1} parent=1 // pred_check
      _
    $region19: #{tpu_custom_call.1} parent=1 // pred_check_branch
      %51 = sbr.rel (0) target = $region21
    $region20: #{tpu_custom_call.1} parent=1 // pred_region
      %53 = dma.done [#allocation5], 64
    $region21: #{tpu_custom_call.1} parent=1 // pred_fallthru
      _
    // Predicated region
    $region22: #{tpu_custom_call.1} parent=1 // pred_check
      _
    $region23: #{tpu_custom_call.1} parent=1 // pred_check_branch
      %55 = sbr.rel (0) target = $region25
    $region24: #{tpu_custom_call.1} parent=1 // pred_region
      %57 = dma.done [#allocation7], 1024
    $region25: #{tpu_custom_call.1} parent=1 // pred_fallthru
      _
    // Predicated region
    $region26: #{tpu_custom_call.1} parent=1 // pred_check
      _
    $region27: #{tpu_custom_call.1} parent=1 // pred_check_branch
      %59 = sbr.rel (0) target = $region29
    $region28: #{tpu_custom_call.1} parent=1 // pred_region
      %61 = dma.done [#allocation7], 128
    $region29: #{tpu_custom_call.1} parent=1 // pred_fallthru
      _
    %p63 = scmp.eq.s32.totalorder 0, 0
    // Predicated region
    $region30: #{tpu_custom_call.1} parent=1 // pred_check
      %p64 = pneg %p63
    $region31: #{tpu_custom_call.1} parent=1 // pred_check_branch
      %66 = sbr.rel (%p64) target = $region33
    $region32: #{tpu_custom_call.1} parent=1 // pred_region
      %67 = vst [vmem:[#allocation2] sm:$0xff] 0.0
    $region33: #{tpu_custom_call.1} parent=1 // pred_fallthru
      _
    %v68 = vld [vmem:[#allocation8] ss:$2 sm:$0xf]
    %s69 = scalar_lea.vmem [#allocation8], 1
    %v70 = vld [vmem:[%s69] ss:$2 sm:$0xf]
    %v71 = vld [vmem:[#allocation4] sm:$0xf]
    %v72 = vld [vmem:[#allocation6] sm:$0xff]
    %v73 = vld [vmem:[#allocation6 + $0x8] sm:$0xff]
    %v74 = vld [vmem:[#allocation6 + $0x10] sm:$0xff]
    %v75 = vld [vmem:[#allocation6 + $0x18] sm:$0xff]
    %v76 = vld [vmem:[#allocation6 + $0x20] sm:$0xff]
    %v77 = vld [vmem:[#allocation6 + $0x28] sm:$0xff]
    %v78 = vld [vmem:[#allocation6 + $0x30] sm:$0xff]
    %v79 = vld [vmem:[#allocation6 + $0x38] sm:$0xff]
    %v81 = vperm.slane %v68, 0
    %v82 = vperm.slane %v68, 1
    %v83 = vperm.slane %v68, 2
    %v84 = vperm.slane %v68, 3
    %v97 = vunpack.c.l.b16 %v72
    %v98 = vunpack.c.h.b16 %v72
    %v99 = vunpack.c.l.b16 %v73
    %v100 = vunpack.c.h.b16 %v73
    %v101 = vunpack.c.l.b16 %v74
    %v102 = vunpack.c.h.b16 %v74
    %v103 = vunpack.c.l.b16 %v75
    %v104 = vunpack.c.h.b16 %v75
    %v105 = vunpack.c.l.b16 %v76
    %v106 = vunpack.c.h.b16 %v76
    %v107 = vunpack.c.l.b16 %v77
    %v108 = vunpack.c.h.b16 %v77
    %v109 = vunpack.c.l.b16 %v78
    %v110 = vunpack.c.h.b16 %v78
    %v111 = vunpack.c.l.b16 %v79
    %v112 = vunpack.c.h.b16 %v79
    %v113 = vpack.c.b16 %v101, %v97
    %v114 = vpack.c.b16 %v102, %v98
    %v115 = vpack.c.b16 %v103, %v99
    %v116 = vpack.c.b16 %v104, %v100
    %v117 = vpack.c.b16 %v109, %v105
    %v118 = vpack.c.b16 %v110, %v106
    %v119 = vpack.c.b16 %v111, %v107
    %v120 = vpack.c.b16 %v112, %v108
    %vm129 = vcmask 261120
    %v131 = vsel %vm129, %v71, 0
    %133 = vmatpush.bf16.msra.mxu0 0
    %134 = vmatpush.bf16.msra.mxu0 0
    %135 = vmatpush.bf16.msra.mxu0 0
    %136 = vmatpush.bf16.msra.mxu0 0
    %137 = vmatpush.bf16.msra.mxu0 0
    %138 = vmatpush.bf16.msra.mxu0 0
    %139 = vmatpush.bf16.msra.mxu0 %v117
    %140 = vmatpush.bf16.msra.mxu0 %v113
    %141 = vmatmul.bf16.gmra.mxu0 %v131
    %v142 = vpop.f32.mrf.mxu0
    %v143 = vadd.f32 %v81, %v142
    %v144 = vpop.f32.mrf.mxu0
    %145 = vdwg.mxu0
    %146 = vmatpush.bf16.msra.mxu0 0
    %147 = vmatpush.bf16.msra.mxu0 0
    %148 = vmatpush.bf16.msra.mxu0 0
    %149 = vmatpush.bf16.msra.mxu0 0
    %150 = vmatpush.bf16.msra.mxu0 0
    %151 = vmatpush.bf16.msra.mxu0 0
    %152 = vmatpush.bf16.msra.mxu0 %v118
    %153 = vmatpush.bf16.msra.mxu0 %v114
    %154 = vmatmul.bf16.gmra.mxu0 %v131
    %v155 = vpop.f32.mrf.mxu0
    %v156 = vadd.f32 %v82, %v155
    %v157 = vpop.f32.mrf.mxu0
    %158 = vdwg.mxu0
    %159 = vmatpush.bf16.msra.mxu0 0
    %160 = vmatpush.bf16.msra.mxu0 0
    %161 = vmatpush.bf16.msra.mxu0 0
    %162 = vmatpush.bf16.msra.mxu0 0
    %163 = vmatpush.bf16.msra.mxu0 0
    %164 = vmatpush.bf16.msra.mxu0 0
    %165 = vmatpush.bf16.msra.mxu0 %v119
    %166 = vmatpush.bf16.msra.mxu0 %v115
    %167 = vmatmul.bf16.gmra.mxu0 %v131
    %v168 = vpop.f32.mrf.mxu0
    %v169 = vadd.f32 %v83, %v168
    %v170 = vpop.f32.mrf.mxu0
    %171 = vdwg.mxu0
    %172 = vmatpush.bf16.msra.mxu0 0
    %173 = vmatpush.bf16.msra.mxu0 0
    %174 = vmatpush.bf16.msra.mxu0 0
    %175 = vmatpush.bf16.msra.mxu0 0
    %176 = vmatpush.bf16.msra.mxu0 0
    %177 = vmatpush.bf16.msra.mxu0 0
    %178 = vmatpush.bf16.msra.mxu0 %v120
    %179 = vmatpush.bf16.msra.mxu0 %v116
    %180 = vmatmul.bf16.gmra.mxu0 %v131
    %v181 = vpop.f32.mrf.mxu0
    %v182 = vadd.f32 %v84, %v181
    %v183 = vpop.f32.mrf.mxu0
    %184 = vdwg.mxu0
    %v185 = vmax.f32 %v143, 0.0
    %v186 = vmax.f32 %v156, 0.0
    %v187 = vmax.f32 %v169, 0.0
    %v188 = vmax.f32 %v182, 0.0
    %vm189 = vcmask 64512
    %v191 = vsel %vm189, 0.125, 0
    %193 = vmatpush.msra.mxu0 0.0
    %194 = vmatpush.msra.mxu0 0.0
    %195 = vmatpush.msra.mxu0 0.0
    %196 = vmatpush.msra.mxu0 0.0
    %197 = vmatpush.msra.mxu0 0.0
    %198 = vmatpush.msra.mxu0 0.0
    %199 = vmatpush.msra.mxu0 0.0
    %200 = vmatpush.msra.mxu0 0.0
    %201 = vmatpush.msra.mxu0 0.0
    %202 = vmatpush.msra.mxu0 0.0
    %203 = vmatpush.msra.mxu0 0.0
    %204 = vmatpush.msra.mxu0 0.0
    %205 = vmatpush.msra.mxu0 0.0
    %206 = vmatpush.msra.mxu0 0.0
    %207 = vmatpush.msra.mxu0 0.0
    %v208 = vand.u32 %v185, 4294901760
    %209 = vmatpush.msra.mxu0 %v208
    %v210 = vand.u32 %v191, 4294901760
    %v211 = vsub.f32 %v191, %v210
    %v212 = vand.u32 %v211, 4294901760
    %v213 = vsub.f32 %v211, %v212
    %v214 = vand.u32 %v213, 4294901760
    %215 = vmatmul.f32.gmra.mxu0 %v214
    %v216 = vpop.f32.mrf.mxu0
    %v217 = vadd.f32 0.0, %v216
    %218 = vdwg.mxu0
    %219 = vmatpush.msra.mxu0 0.0
    %220 = vmatpush.msra.mxu0 0.0
    %221 = vmatpush.msra.mxu0 0.0
    %222 = vmatpush.msra.mxu0 0.0
    %223 = vmatpush.msra.mxu0 0.0
    %224 = vmatpush.msra.mxu0 0.0
    %225 = vmatpush.msra.mxu0 0.0
    %226 = vmatpush.msra.mxu0 0.0
    %227 = vmatpush.msra.mxu0 0.0
    %228 = vmatpush.msra.mxu0 0.0
    %229 = vmatpush.msra.mxu0 0.0
    %230 = vmatpush.msra.mxu0 0.0
    %231 = vmatpush.msra.mxu0 0.0
    %232 = vmatpush.msra.mxu0 0.0
    %233 = vmatpush.msra.mxu0 0.0
    %v234 = vand.u32 %v185, 4294901760
    %v235 = vsub.f32 %v185, %v234
    %v236 = vand.u32 %v235, 4294901760
    %v237 = vsub.f32 %v235, %v236
    %v238 = vand.u32 %v237, 4294901760
    %239 = vmatpush.msra.mxu0 %v238
    %v240 = vand.u32 %v191, 4294901760
    %241 = vmatmul.f32.gmra.mxu0 %v240
    %v242 = vpop.f32.mrf.mxu0
    %v243 = vadd.f32 %v217, %v242
    %244 = vdwg.mxu0
    %245 = vmatpush.msra.mxu0 0.0
    %246 = vmatpush.msra.mxu0 0.0
    %247 = vmatpush.msra.mxu0 0.0
    %248 = vmatpush.msra.mxu0 0.0
    %249 = vmatpush.msra.mxu0 0.0
    %250 = vmatpush.msra.mxu0 0.0
    %251 = vmatpush.msra.mxu0 0.0
    %252 = vmatpush.msra.mxu0 0.0
    %253 = vmatpush.msra.mxu0 0.0
    %254 = vmatpush.msra.mxu0 0.0
    %255 = vmatpush.msra.mxu0 0.0
    %256 = vmatpush.msra.mxu0 0.0
    %257 = vmatpush.msra.mxu0 0.0
    %258 = vmatpush.msra.mxu0 0.0
    %259 = vmatpush.msra.mxu0 0.0
    %v260 = vand.u32 %v185, 4294901760
    %v261 = vsub.f32 %v185, %v260
    %262 = vmatpush.msra.mxu0 %v261
    %v263 = vand.u32 %v191, 4294901760
    %v264 = vsub.f32 %v191, %v263
    %265 = vmatmul.f32.gmra.mxu0 %v264
    %v266 = vpop.f32.mrf.mxu0
    %v267 = vadd.f32 %v243, %v266
    %268 = vdwg.mxu0
    %269 = vmatpush.msra.mxu0 0.0
    %270 = vmatpush.msra.mxu0 0.0
    %271 = vmatpush.msra.mxu0 0.0
    %272 = vmatpush.msra.mxu0 0.0
    %273 = vmatpush.msra.mxu0 0.0
    %274 = vmatpush.msra.mxu0 0.0
    %275 = vmatpush.msra.mxu0 0.0
    %276 = vmatpush.msra.mxu0 0.0
    %277 = vmatpush.msra.mxu0 0.0
    %278 = vmatpush.msra.mxu0 0.0
    %279 = vmatpush.msra.mxu0 0.0
    %280 = vmatpush.msra.mxu0 0.0
    %281 = vmatpush.msra.mxu0 0.0
    %282 = vmatpush.msra.mxu0 0.0
    %283 = vmatpush.msra.mxu0 0.0
    %v284 = vand.u32 %v185, 4294901760
    %285 = vmatpush.msra.mxu0 %v284
    %v286 = vand.u32 %v191, 4294901760
    %v287 = vsub.f32 %v191, %v286
    %v288 = vand.u32 %v287, 4294901760
    %289 = vmatmul.f32.gmra.mxu0 %v288
    %v290 = vpop.f32.mrf.mxu0
    %v291 = vadd.f32 %v267, %v290
    %292 = vdwg.mxu0
    %293 = vmatpush.msra.mxu0 0.0
    %294 = vmatpush.msra.mxu0 0.0
    %295 = vmatpush.msra.mxu0 0.0
    %296 = vmatpush.msra.mxu0 0.0
    %297 = vmatpush.msra.mxu0 0.0
    %298 = vmatpush.msra.mxu0 0.0
    %299 = vmatpush.msra.mxu0 0.0
    %300 = vmatpush.msra.mxu0 0.0
    %301 = vmatpush.msra.mxu0 0.0
    %302 = vmatpush.msra.mxu0 0.0
    %303 = vmatpush.msra.mxu0 0.0
    %304 = vmatpush.msra.mxu0 0.0
    %305 = vmatpush.msra.mxu0 0.0
    %306 = vmatpush.msra.mxu0 0.0
    %307 = vmatpush.msra.mxu0 0.0
    %v308 = vand.u32 %v185, 4294901760
    %v309 = vsub.f32 %v185, %v308
    %v310 = vand.u32 %v309, 4294901760
    %311 = vmatpush.msra.mxu0 %v310
    %v312 = vand.u32 %v191, 4294901760
    %313 = vmatmul.f32.gmra.mxu0 %v312
    %v314 = vpop.f32.mrf.mxu0
    %v315 = vadd.f32 %v291, %v314
    %316 = vdwg.mxu0
    %317 = vmatpush.msra.mxu0 0.0
    %318 = vmatpush.msra.mxu0 0.0
    %319 = vmatpush.msra.mxu0 0.0
    %320 = vmatpush.msra.mxu0 0.0
    %321 = vmatpush.msra.mxu0 0.0
    %322 = vmatpush.msra.mxu0 0.0
    %323 = vmatpush.msra.mxu0 0.0
    %324 = vmatpush.msra.mxu0 0.0
    %325 = vmatpush.msra.mxu0 0.0
    %326 = vmatpush.msra.mxu0 0.0
    %327 = vmatpush.msra.mxu0 0.0
    %328 = vmatpush.msra.mxu0 0.0
    %329 = vmatpush.msra.mxu0 0.0
    %330 = vmatpush.msra.mxu0 0.0
    %331 = vmatpush.msra.mxu0 0.0
    %v332 = vand.u32 %v185, 4294901760
    %333 = vmatpush.msra.mxu0 %v332
    %v334 = vand.u32 %v191, 4294901760
    %335 = vmatmul.f32.gmra.mxu0 %v334
    %v336 = vpop.f32.mrf.mxu0
    %v337 = vadd.f32 %v315, %v336
    %338 = vdwg.mxu0
    %339 = vmatpush.msra.mxu0 0.0
    %340 = vmatpush.msra.mxu0 0.0
    %341 = vmatpush.msra.mxu0 0.0
    %342 = vmatpush.msra.mxu0 0.0
    %343 = vmatpush.msra.mxu0 0.0
    %344 = vmatpush.msra.mxu0 0.0
    %345 = vmatpush.msra.mxu0 0.0
    %346 = vmatpush.msra.mxu0 0.0
    %347 = vmatpush.msra.mxu0 0.0
    %348 = vmatpush.msra.mxu0 0.0
    %349 = vmatpush.msra.mxu0 0.0
    %350 = vmatpush.msra.mxu0 0.0
    %351 = vmatpush.msra.mxu0 0.0
    %352 = vmatpush.msra.mxu0 0.0
    %353 = vmatpush.msra.mxu0 0.0
    %v354 = vand.u32 %v186, 4294901760
    %355 = vmatpush.msra.mxu0 %v354
    %v356 = vand.u32 %v191, 4294901760
    %v357 = vsub.f32 %v191, %v356
    %v358 = vand.u32 %v357, 4294901760
    %v359 = vsub.f32 %v357, %v358
    %v360 = vand.u32 %v359, 4294901760
    %361 = vmatmul.f32.gmra.mxu0 %v360
    %v362 = vpop.f32.mrf.mxu0
    %v363 = vadd.f32 0.0, %v362
    %364 = vdwg.mxu0
    %365 = vmatpush.msra.mxu0 0.0
    %366 = vmatpush.msra.mxu0 0.0
    %367 = vmatpush.msra.mxu0 0.0
    %368 = vmatpush.msra.mxu0 0.0
    %369 = vmatpush.msra.mxu0 0.0
    %370 = vmatpush.msra.mxu0 0.0
    %371 = vmatpush.msra.mxu0 0.0
    %372 = vmatpush.msra.mxu0 0.0
    %373 = vmatpush.msra.mxu0 0.0
    %374 = vmatpush.msra.mxu0 0.0
    %375 = vmatpush.msra.mxu0 0.0
    %376 = vmatpush.msra.mxu0 0.0
    %377 = vmatpush.msra.mxu0 0.0
    %378 = vmatpush.msra.mxu0 0.0
    %379 = vmatpush.msra.mxu0 0.0
    %v380 = vand.u32 %v186, 4294901760
    %v381 = vsub.f32 %v186, %v380
    %v382 = vand.u32 %v381, 4294901760
    %v383 = vsub.f32 %v381, %v382
    %v384 = vand.u32 %v383, 4294901760
    %385 = vmatpush.msra.mxu0 %v384
    %v386 = vand.u32 %v191, 4294901760
    %387 = vmatmul.f32.gmra.mxu0 %v386
    %v388 = vpop.f32.mrf.mxu0
    %v389 = vadd.f32 %v363, %v388
    %390 = vdwg.mxu0
    %391 = vmatpush.msra.mxu0 0.0
    %392 = vmatpush.msra.mxu0 0.0
    %393 = vmatpush.msra.mxu0 0.0
    %394 = vmatpush.msra.mxu0 0.0
    %395 = vmatpush.msra.mxu0 0.0
    %396 = vmatpush.msra.mxu0 0.0
    %397 = vmatpush.msra.mxu0 0.0
    %398 = vmatpush.msra.mxu0 0.0
    %399 = vmatpush.msra.mxu0 0.0
    %400 = vmatpush.msra.mxu0 0.0
    %401 = vmatpush.msra.mxu0 0.0
    %402 = vmatpush.msra.mxu0 0.0
    %403 = vmatpush.msra.mxu0 0.0
    %404 = vmatpush.msra.mxu0 0.0
    %405 = vmatpush.msra.mxu0 0.0
    %v406 = vand.u32 %v186, 4294901760
    %v407 = vsub.f32 %v186, %v406
    %408 = vmatpush.msra.mxu0 %v407
    %v409 = vand.u32 %v191, 4294901760
    %v410 = vsub.f32 %v191, %v409
    %411 = vmatmul.f32.gmra.mxu0 %v410
    %v412 = vpop.f32.mrf.mxu0
    %v413 = vadd.f32 %v389, %v412
    %414 = vdwg.mxu0
    %415 = vmatpush.msra.mxu0 0.0
    %416 = vmatpush.msra.mxu0 0.0
    %417 = vmatpush.msra.mxu0 0.0
    %418 = vmatpush.msra.mxu0 0.0
    %419 = vmatpush.msra.mxu0 0.0
    %420 = vmatpush.msra.mxu0 0.0
    %421 = vmatpush.msra.mxu0 0.0
    %422 = vmatpush.msra.mxu0 0.0
    %423 = vmatpush.msra.mxu0 0.0
    %424 = vmatpush.msra.mxu0 0.0
    %425 = vmatpush.msra.mxu0 0.0
    %426 = vmatpush.msra.mxu0 0.0
    %427 = vmatpush.msra.mxu0 0.0
    %428 = vmatpush.msra.mxu0 0.0
    %429 = vmatpush.msra.mxu0 0.0
    %v430 = vand.u32 %v186, 4294901760
    %431 = vmatpush.msra.mxu0 %v430
    %v432 = vand.u32 %v191, 4294901760
    %v433 = vsub.f32 %v191, %v432
    %v434 = vand.u32 %v433, 4294901760
    %435 = vmatmul.f32.gmra.mxu0 %v434
    %v436 = vpop.f32.mrf.mxu0
    %v437 = vadd.f32 %v413, %v436
    %438 = vdwg.mxu0
    %439 = vmatpush.msra.mxu0 0.0
    %440 = vmatpush.msra.mxu0 0.0
    %441 = vmatpush.msra.mxu0 0.0
    %442 = vmatpush.msra.mxu0 0.0
    %443 = vmatpush.msra.mxu0 0.0
    %444 = vmatpush.msra.mxu0 0.0
    %445 = vmatpush.msra.mxu0 0.0
    %446 = vmatpush.msra.mxu0 0.0
    %447 = vmatpush.msra.mxu0 0.0
    %448 = vmatpush.msra.mxu0 0.0
    %449 = vmatpush.msra.mxu0 0.0
    %450 = vmatpush.msra.mxu0 0.0
    %451 = vmatpush.msra.mxu0 0.0
    %452 = vmatpush.msra.mxu0 0.0
    %453 = vmatpush.msra.mxu0 0.0
    %v454 = vand.u32 %v186, 4294901760
    %v455 = vsub.f32 %v186, %v454
    %v456 = vand.u32 %v455, 4294901760
    %457 = vmatpush.msra.mxu0 %v456
    %v458 = vand.u32 %v191, 4294901760
    %459 = vmatmul.f32.gmra.mxu0 %v458
    %v460 = vpop.f32.mrf.mxu0
    %v461 = vadd.f32 %v437, %v460
    %462 = vdwg.mxu0
    %463 = vmatpush.msra.mxu0 0.0
    %464 = vmatpush.msra.mxu0 0.0
    %465 = vmatpush.msra.mxu0 0.0
    %466 = vmatpush.msra.mxu0 0.0
    %467 = vmatpush.msra.mxu0 0.0
    %468 = vmatpush.msra.mxu0 0.0
    %469 = vmatpush.msra.mxu0 0.0
    %470 = vmatpush.msra.mxu0 0.0
    %471 = vmatpush.msra.mxu0 0.0
    %472 = vmatpush.msra.mxu0 0.0
    %473 = vmatpush.msra.mxu0 0.0
    %474 = vmatpush.msra.mxu0 0.0
    %475 = vmatpush.msra.mxu0 0.0
    %476 = vmatpush.msra.mxu0 0.0
    %477 = vmatpush.msra.mxu0 0.0
    %v478 = vand.u32 %v186, 4294901760
    %479 = vmatpush.msra.mxu0 %v478
    %v480 = vand.u32 %v191, 4294901760
    %481 = vmatmul.f32.gmra.mxu0 %v480
    %v482 = vpop.f32.mrf.mxu0
    %v483 = vadd.f32 %v461, %v482
    %484 = vdwg.mxu0
    %485 = vmatpush.msra.mxu0 0.0
    %486 = vmatpush.msra.mxu0 0.0
    %487 = vmatpush.msra.mxu0 0.0
    %488 = vmatpush.msra.mxu0 0.0
    %489 = vmatpush.msra.mxu0 0.0
    %490 = vmatpush.msra.mxu0 0.0
    %491 = vmatpush.msra.mxu0 0.0
    %492 = vmatpush.msra.mxu0 0.0
    %493 = vmatpush.msra.mxu0 0.0
    %494 = vmatpush.msra.mxu0 0.0
    %495 = vmatpush.msra.mxu0 0.0
    %496 = vmatpush.msra.mxu0 0.0
    %497 = vmatpush.msra.mxu0 0.0
    %498 = vmatpush.msra.mxu0 0.0
    %499 = vmatpush.msra.mxu0 0.0
    %v500 = vand.u32 %v187, 4294901760
    %501 = vmatpush.msra.mxu0 %v500
    %v502 = vand.u32 %v191, 4294901760
    %v503 = vsub.f32 %v191, %v502
    %v504 = vand.u32 %v503, 4294901760
    %v505 = vsub.f32 %v503, %v504
    %v506 = vand.u32 %v505, 4294901760
    %507 = vmatmul.f32.gmra.mxu0 %v506
    %v508 = vpop.f32.mrf.mxu0
    %v509 = vadd.f32 0.0, %v508
    %510 = vdwg.mxu0
    %511 = vmatpush.msra.mxu0 0.0
    %512 = vmatpush.msra.mxu0 0.0
    %513 = vmatpush.msra.mxu0 0.0
    %514 = vmatpush.msra.mxu0 0.0
    %515 = vmatpush.msra.mxu0 0.0
    %516 = vmatpush.msra.mxu0 0.0
    %517 = vmatpush.msra.mxu0 0.0
    %518 = vmatpush.msra.mxu0 0.0
    %519 = vmatpush.msra.mxu0 0.0
    %520 = vmatpush.msra.mxu0 0.0
    %521 = vmatpush.msra.mxu0 0.0
    %522 = vmatpush.msra.mxu0 0.0
    %523 = vmatpush.msra.mxu0 0.0
    %524 = vmatpush.msra.mxu0 0.0
    %525 = vmatpush.msra.mxu0 0.0
    %v526 = vand.u32 %v187, 4294901760
    %v527 = vsub.f32 %v187, %v526
    %v528 = vand.u32 %v527, 4294901760
    %v529 = vsub.f32 %v527, %v528
    %v530 = vand.u32 %v529, 4294901760
    %531 = vmatpush.msra.mxu0 %v530
    %v532 = vand.u32 %v191, 4294901760
    %533 = vmatmul.f32.gmra.mxu0 %v532
    %v534 = vpop.f32.mrf.mxu0
    %v535 = vadd.f32 %v509, %v534
    %536 = vdwg.mxu0
    %537 = vmatpush.msra.mxu0 0.0
    %538 = vmatpush.msra.mxu0 0.0
    %539 = vmatpush.msra.mxu0 0.0
    %540 = vmatpush.msra.mxu0 0.0
    %541 = vmatpush.msra.mxu0 0.0
    %542 = vmatpush.msra.mxu0 0.0
    %543 = vmatpush.msra.mxu0 0.0
    %544 = vmatpush.msra.mxu0 0.0
    %545 = vmatpush.msra.mxu0 0.0
    %546 = vmatpush.msra.mxu0 0.0
    %547 = vmatpush.msra.mxu0 0.0
    %548 = vmatpush.msra.mxu0 0.0
    %549 = vmatpush.msra.mxu0 0.0
    %550 = vmatpush.msra.mxu0 0.0
    %551 = vmatpush.msra.mxu0 0.0
    %v552 = vand.u32 %v187, 4294901760
    %v553 = vsub.f32 %v187, %v552
    %554 = vmatpush.msra.mxu0 %v553
    %v555 = vand.u32 %v191, 4294901760
    %v556 = vsub.f32 %v191, %v555
    %557 = vmatmul.f32.gmra.mxu0 %v556
    %v558 = vpop.f32.mrf.mxu0
    %v559 = vadd.f32 %v535, %v558
    %560 = vdwg.mxu0
    %561 = vmatpush.msra.mxu0 0.0
    %562 = vmatpush.msra.mxu0 0.0
    %563 = vmatpush.msra.mxu0 0.0
    %564 = vmatpush.msra.mxu0 0.0
    %565 = vmatpush.msra.mxu0 0.0
    %566 = vmatpush.msra.mxu0 0.0
    %567 = vmatpush.msra.mxu0 0.0
    %568 = vmatpush.msra.mxu0 0.0
    %569 = vmatpush.msra.mxu0 0.0
    %570 = vmatpush.msra.mxu0 0.0
    %571 = vmatpush.msra.mxu0 0.0
    %572 = vmatpush.msra.mxu0 0.0
    %573 = vmatpush.msra.mxu0 0.0
    %574 = vmatpush.msra.mxu0 0.0
    %575 = vmatpush.msra.mxu0 0.0
    %v576 = vand.u32 %v187, 4294901760
    %577 = vmatpush.msra.mxu0 %v576
    %v578 = vand.u32 %v191, 4294901760
    %v579 = vsub.f32 %v191, %v578
    %v580 = vand.u32 %v579, 4294901760
    %581 = vmatmul.f32.gmra.mxu0 %v580
    %v582 = vpop.f32.mrf.mxu0
    %v583 = vadd.f32 %v559, %v582
    %584 = vdwg.mxu0
    %585 = vmatpush.msra.mxu0 0.0
    %586 = vmatpush.msra.mxu0 0.0
    %587 = vmatpush.msra.mxu0 0.0
    %588 = vmatpush.msra.mxu0 0.0
    %589 = vmatpush.msra.mxu0 0.0
    %590 = vmatpush.msra.mxu0 0.0
    %591 = vmatpush.msra.mxu0 0.0
    %592 = vmatpush.msra.mxu0 0.0
    %593 = vmatpush.msra.mxu0 0.0
    %594 = vmatpush.msra.mxu0 0.0
    %595 = vmatpush.msra.mxu0 0.0
    %596 = vmatpush.msra.mxu0 0.0
    %597 = vmatpush.msra.mxu0 0.0
    %598 = vmatpush.msra.mxu0 0.0
    %599 = vmatpush.msra.mxu0 0.0
    %v600 = vand.u32 %v187, 4294901760
    %v601 = vsub.f32 %v187, %v600
    %v602 = vand.u32 %v601, 4294901760
    %603 = vmatpush.msra.mxu0 %v602
    %v604 = vand.u32 %v191, 4294901760
    %605 = vmatmul.f32.gmra.mxu0 %v604
    %v606 = vpop.f32.mrf.mxu0
    %v607 = vadd.f32 %v583, %v606
    %608 = vdwg.mxu0
    %609 = vmatpush.msra.mxu0 0.0
    %610 = vmatpush.msra.mxu0 0.0
    %611 = vmatpush.msra.mxu0 0.0
    %612 = vmatpush.msra.mxu0 0.0
    %613 = vmatpush.msra.mxu0 0.0
    %614 = vmatpush.msra.mxu0 0.0
    %615 = vmatpush.msra.mxu0 0.0
    %616 = vmatpush.msra.mxu0 0.0
    %617 = vmatpush.msra.mxu0 0.0
    %618 = vmatpush.msra.mxu0 0.0
    %619 = vmatpush.msra.mxu0 0.0
    %620 = vmatpush.msra.mxu0 0.0
    %621 = vmatpush.msra.mxu0 0.0
    %622 = vmatpush.msra.mxu0 0.0
    %623 = vmatpush.msra.mxu0 0.0
    %v624 = vand.u32 %v187, 4294901760
    %625 = vmatpush.msra.mxu0 %v624
    %v626 = vand.u32 %v191, 4294901760
    %627 = vmatmul.f32.gmra.mxu0 %v626
    %v628 = vpop.f32.mrf.mxu0
    %v629 = vadd.f32 %v607, %v628
    %630 = vdwg.mxu0
    %631 = vmatpush.msra.mxu0 0.0
    %632 = vmatpush.msra.mxu0 0.0
    %633 = vmatpush.msra.mxu0 0.0
    %634 = vmatpush.msra.mxu0 0.0
    %635 = vmatpush.msra.mxu0 0.0
    %636 = vmatpush.msra.mxu0 0.0
    %637 = vmatpush.msra.mxu0 0.0
    %638 = vmatpush.msra.mxu0 0.0
    %639 = vmatpush.msra.mxu0 0.0
    %640 = vmatpush.msra.mxu0 0.0
    %641 = vmatpush.msra.mxu0 0.0
    %642 = vmatpush.msra.mxu0 0.0
    %643 = vmatpush.msra.mxu0 0.0
    %644 = vmatpush.msra.mxu0 0.0
    %645 = vmatpush.msra.mxu0 0.0
    %v646 = vand.u32 %v188, 4294901760
    %647 = vmatpush.msra.mxu0 %v646
    %v648 = vand.u32 %v191, 4294901760
    %v649 = vsub.f32 %v191, %v648
    %v650 = vand.u32 %v649, 4294901760
    %v651 = vsub.f32 %v649, %v650
    %v652 = vand.u32 %v651, 4294901760
    %653 = vmatmul.f32.gmra.mxu0 %v652
    %v654 = vpop.f32.mrf.mxu0
    %v655 = vadd.f32 0.0, %v654
    %656 = vdwg.mxu0
    %657 = vmatpush.msra.mxu0 0.0
    %658 = vmatpush.msra.mxu0 0.0
    %659 = vmatpush.msra.mxu0 0.0
    %660 = vmatpush.msra.mxu0 0.0
    %661 = vmatpush.msra.mxu0 0.0
    %662 = vmatpush.msra.mxu0 0.0
    %663 = vmatpush.msra.mxu0 0.0
    %664 = vmatpush.msra.mxu0 0.0
    %665 = vmatpush.msra.mxu0 0.0
    %666 = vmatpush.msra.mxu0 0.0
    %667 = vmatpush.msra.mxu0 0.0
    %668 = vmatpush.msra.mxu0 0.0
    %669 = vmatpush.msra.mxu0 0.0
    %670 = vmatpush.msra.mxu0 0.0
    %671 = vmatpush.msra.mxu0 0.0
    %v672 = vand.u32 %v188, 4294901760
    %v673 = vsub.f32 %v188, %v672
    %v674 = vand.u32 %v673, 4294901760
    %v675 = vsub.f32 %v673, %v674
    %v676 = vand.u32 %v675, 4294901760
    %677 = vmatpush.msra.mxu0 %v676
    %v678 = vand.u32 %v191, 4294901760
    %679 = vmatmul.f32.gmra.mxu0 %v678
    %v680 = vpop.f32.mrf.mxu0
    %v681 = vadd.f32 %v655, %v680
    %682 = vdwg.mxu0
    %683 = vmatpush.msra.mxu0 0.0
    %684 = vmatpush.msra.mxu0 0.0
    %685 = vmatpush.msra.mxu0 0.0
    %686 = vmatpush.msra.mxu0 0.0
    %687 = vmatpush.msra.mxu0 0.0
    %688 = vmatpush.msra.mxu0 0.0
    %689 = vmatpush.msra.mxu0 0.0
    %690 = vmatpush.msra.mxu0 0.0
    %691 = vmatpush.msra.mxu0 0.0
    %692 = vmatpush.msra.mxu0 0.0
    %693 = vmatpush.msra.mxu0 0.0
    %694 = vmatpush.msra.mxu0 0.0
    %695 = vmatpush.msra.mxu0 0.0
    %696 = vmatpush.msra.mxu0 0.0
    %697 = vmatpush.msra.mxu0 0.0
    %v698 = vand.u32 %v188, 4294901760
    %v699 = vsub.f32 %v188, %v698
    %700 = vmatpush.msra.mxu0 %v699
    %v701 = vand.u32 %v191, 4294901760
    %v702 = vsub.f32 %v191, %v701
    %703 = vmatmul.f32.gmra.mxu0 %v702
    %v704 = vpop.f32.mrf.mxu0
    %v705 = vadd.f32 %v681, %v704
    %706 = vdwg.mxu0
    %707 = vmatpush.msra.mxu0 0.0
    %708 = vmatpush.msra.mxu0 0.0
    %709 = vmatpush.msra.mxu0 0.0
    %710 = vmatpush.msra.mxu0 0.0
    %711 = vmatpush.msra.mxu0 0.0
    %712 = vmatpush.msra.mxu0 0.0
    %713 = vmatpush.msra.mxu0 0.0
    %714 = vmatpush.msra.mxu0 0.0
    %715 = vmatpush.msra.mxu0 0.0
    %716 = vmatpush.msra.mxu0 0.0
    %717 = vmatpush.msra.mxu0 0.0
    %718 = vmatpush.msra.mxu0 0.0
    %719 = vmatpush.msra.mxu0 0.0
    %720 = vmatpush.msra.mxu0 0.0
    %721 = vmatpush.msra.mxu0 0.0
    %v722 = vand.u32 %v188, 4294901760
    %723 = vmatpush.msra.mxu0 %v722
    %v724 = vand.u32 %v191, 4294901760
    %v725 = vsub.f32 %v191, %v724
    %v726 = vand.u32 %v725, 4294901760
    %727 = vmatmul.f32.gmra.mxu0 %v726
    %v728 = vpop.f32.mrf.mxu0
    %v729 = vadd.f32 %v705, %v728
    %730 = vdwg.mxu0
    %731 = vmatpush.msra.mxu0 0.0
    %732 = vmatpush.msra.mxu0 0.0
    %733 = vmatpush.msra.mxu0 0.0
    %734 = vmatpush.msra.mxu0 0.0
    %735 = vmatpush.msra.mxu0 0.0
    %736 = vmatpush.msra.mxu0 0.0
    %737 = vmatpush.msra.mxu0 0.0
    %738 = vmatpush.msra.mxu0 0.0
    %739 = vmatpush.msra.mxu0 0.0
    %740 = vmatpush.msra.mxu0 0.0
    %741 = vmatpush.msra.mxu0 0.0
    %742 = vmatpush.msra.mxu0 0.0
    %743 = vmatpush.msra.mxu0 0.0
    %744 = vmatpush.msra.mxu0 0.0
    %745 = vmatpush.msra.mxu0 0.0
    %v746 = vand.u32 %v188, 4294901760
    %v747 = vsub.f32 %v188, %v746
    %v748 = vand.u32 %v747, 4294901760
    %749 = vmatpush.msra.mxu0 %v748
    %v750 = vand.u32 %v191, 4294901760
    %751 = vmatmul.f32.gmra.mxu0 %v750
    %v752 = vpop.f32.mrf.mxu0
    %v753 = vadd.f32 %v729, %v752
    %754 = vdwg.mxu0
    %755 = vmatpush.msra.mxu0 0.0
    %756 = vmatpush.msra.mxu0 0.0
    %757 = vmatpush.msra.mxu0 0.0
    %758 = vmatpush.msra.mxu0 0.0
    %759 = vmatpush.msra.mxu0 0.0
    %760 = vmatpush.msra.mxu0 0.0
    %761 = vmatpush.msra.mxu0 0.0
    %762 = vmatpush.msra.mxu0 0.0
    %763 = vmatpush.msra.mxu0 0.0
    %764 = vmatpush.msra.mxu0 0.0
    %765 = vmatpush.msra.mxu0 0.0
    %766 = vmatpush.msra.mxu0 0.0
    %767 = vmatpush.msra.mxu0 0.0
    %768 = vmatpush.msra.mxu0 0.0
    %769 = vmatpush.msra.mxu0 0.0
    %v770 = vand.u32 %v188, 4294901760
    %771 = vmatpush.msra.mxu0 %v770
    %v772 = vand.u32 %v191, 4294901760
    %773 = vmatmul.f32.gmra.mxu0 %v772
    %v774 = vpop.f32.mrf.mxu0
    %v775 = vadd.f32 %v753, %v774
    %776 = vdwg.mxu0
    %v777 = vsub.f32 %v185, %v337
    %v778 = vsub.f32 %v186, %v483
    %v779 = vsub.f32 %v187, %v629
    %v780 = vsub.f32 %v188, %v775
    %v781 = vmul.f32 %v777, %v777
    %v782 = vmul.f32 %v778, %v778
    %v783 = vmul.f32 %v779, %v779
    %v784 = vmul.f32 %v780, %v780
    %785 = vmatpush.msra.mxu0 0.0
    %786 = vmatpush.msra.mxu0 0.0
    %787 = vmatpush.msra.mxu0 0.0
    %788 = vmatpush.msra.mxu0 0.0
    %789 = vmatpush.msra.mxu0 0.0
    %790 = vmatpush.msra.mxu0 0.0
    %791 = vmatpush.msra.mxu0 0.0
    %792 = vmatpush.msra.mxu0 0.0
    %793 = vmatpush.msra.mxu0 0.0
    %794 = vmatpush.msra.mxu0 0.0
    %795 = vmatpush.msra.mxu0 0.0
    %796 = vmatpush.msra.mxu0 0.0
    %797 = vmatpush.msra.mxu0 0.0
    %798 = vmatpush.msra.mxu0 0.0
    %799 = vmatpush.msra.mxu0 0.0
    %v800 = vand.u32 %v781, 4294901760
    %801 = vmatpush.msra.mxu0 %v800
    %v802 = vand.u32 %v191, 4294901760
    %v803 = vsub.f32 %v191, %v802
    %v804 = vand.u32 %v803, 4294901760
    %v805 = vsub.f32 %v803, %v804
    %v806 = vand.u32 %v805, 4294901760
    %807 = vmatmul.f32.gmra.mxu0 %v806
    %v808 = vpop.f32.mrf.mxu0
    %v809 = vadd.f32 1e-05, %v808
    %810 = vdwg.mxu0
    %811 = vmatpush.msra.mxu0 0.0
    %812 = vmatpush.msra.mxu0 0.0
    %813 = vmatpush.msra.mxu0 0.0
    %814 = vmatpush.msra.mxu0 0.0
    %815 = vmatpush.msra.mxu0 0.0
    %816 = vmatpush.msra.mxu0 0.0
    %817 = vmatpush.msra.mxu0 0.0
    %818 = vmatpush.msra.mxu0 0.0
    %819 = vmatpush.msra.mxu0 0.0
    %820 = vmatpush.msra.mxu0 0.0
    %821 = vmatpush.msra.mxu0 0.0
    %822 = vmatpush.msra.mxu0 0.0
    %823 = vmatpush.msra.mxu0 0.0
    %824 = vmatpush.msra.mxu0 0.0
    %825 = vmatpush.msra.mxu0 0.0
    %v826 = vand.u32 %v781, 4294901760
    %v827 = vsub.f32 %v781, %v826
    %v828 = vand.u32 %v827, 4294901760
    %v829 = vsub.f32 %v827, %v828
    %v830 = vand.u32 %v829, 4294901760
    %831 = vmatpush.msra.mxu0 %v830
    %v832 = vand.u32 %v191, 4294901760
    %833 = vmatmul.f32.gmra.mxu0 %v832
    %v834 = vpop.f32.mrf.mxu0
    %v835 = vadd.f32 %v809, %v834
    %836 = vdwg.mxu0
    %837 = vmatpush.msra.mxu0 0.0
    %838 = vmatpush.msra.mxu0 0.0
    %839 = vmatpush.msra.mxu0 0.0
    %840 = vmatpush.msra.mxu0 0.0
    %841 = vmatpush.msra.mxu0 0.0
    %842 = vmatpush.msra.mxu0 0.0
    %843 = vmatpush.msra.mxu0 0.0
    %844 = vmatpush.msra.mxu0 0.0
    %845 = vmatpush.msra.mxu0 0.0
    %846 = vmatpush.msra.mxu0 0.0
    %847 = vmatpush.msra.mxu0 0.0
    %848 = vmatpush.msra.mxu0 0.0
    %849 = vmatpush.msra.mxu0 0.0
    %850 = vmatpush.msra.mxu0 0.0
    %851 = vmatpush.msra.mxu0 0.0
    %v852 = vand.u32 %v781, 4294901760
    %v853 = vsub.f32 %v781, %v852
    %854 = vmatpush.msra.mxu0 %v853
    %v855 = vand.u32 %v191, 4294901760
    %v856 = vsub.f32 %v191, %v855
    %857 = vmatmul.f32.gmra.mxu0 %v856
    %v858 = vpop.f32.mrf.mxu0
    %v859 = vadd.f32 %v835, %v858
    %860 = vdwg.mxu0
    %861 = vmatpush.msra.mxu0 0.0
    %862 = vmatpush.msra.mxu0 0.0
    %863 = vmatpush.msra.mxu0 0.0
    %864 = vmatpush.msra.mxu0 0.0
    %865 = vmatpush.msra.mxu0 0.0
    %866 = vmatpush.msra.mxu0 0.0
    %867 = vmatpush.msra.mxu0 0.0
    %868 = vmatpush.msra.mxu0 0.0
    %869 = vmatpush.msra.mxu0 0.0
    %870 = vmatpush.msra.mxu0 0.0
    %871 = vmatpush.msra.mxu0 0.0
    %872 = vmatpush.msra.mxu0 0.0
    %873 = vmatpush.msra.mxu0 0.0
    %874 = vmatpush.msra.mxu0 0.0
    %875 = vmatpush.msra.mxu0 0.0
    %v876 = vand.u32 %v781, 4294901760
    %877 = vmatpush.msra.mxu0 %v876
    %v878 = vand.u32 %v191, 4294901760
    %v879 = vsub.f32 %v191, %v878
    %v880 = vand.u32 %v879, 4294901760
    %881 = vmatmul.f32.gmra.mxu0 %v880
    %v882 = vpop.f32.mrf.mxu0
    %v883 = vadd.f32 %v859, %v882
    %884 = vdwg.mxu0
    %885 = vmatpush.msra.mxu0 0.0
    %886 = vmatpush.msra.mxu0 0.0
    %887 = vmatpush.msra.mxu0 0.0
    %888 = vmatpush.msra.mxu0 0.0
    %889 = vmatpush.msra.mxu0 0.0
    %890 = vmatpush.msra.mxu0 0.0
    %891 = vmatpush.msra.mxu0 0.0
    %892 = vmatpush.msra.mxu0 0.0
    %893 = vmatpush.msra.mxu0 0.0
    %894 = vmatpush.msra.mxu0 0.0
    %895 = vmatpush.msra.mxu0 0.0
    %896 = vmatpush.msra.mxu0 0.0
    %897 = vmatpush.msra.mxu0 0.0
    %898 = vmatpush.msra.mxu0 0.0
    %899 = vmatpush.msra.mxu0 0.0
    %v900 = vand.u32 %v781, 4294901760
    %v901 = vsub.f32 %v781, %v900
    %v902 = vand.u32 %v901, 4294901760
    %903 = vmatpush.msra.mxu0 %v902
    %v904 = vand.u32 %v191, 4294901760
    %905 = vmatmul.f32.gmra.mxu0 %v904
    %v906 = vpop.f32.mrf.mxu0
    %v907 = vadd.f32 %v883, %v906
    %908 = vdwg.mxu0
    %909 = vmatpush.msra.mxu0 0.0
    %910 = vmatpush.msra.mxu0 0.0
    %911 = vmatpush.msra.mxu0 0.0
    %912 = vmatpush.msra.mxu0 0.0
    %913 = vmatpush.msra.mxu0 0.0
    %914 = vmatpush.msra.mxu0 0.0
    %915 = vmatpush.msra.mxu0 0.0
    %916 = vmatpush.msra.mxu0 0.0
    %917 = vmatpush.msra.mxu0 0.0
    %918 = vmatpush.msra.mxu0 0.0
    %919 = vmatpush.msra.mxu0 0.0
    %920 = vmatpush.msra.mxu0 0.0
    %921 = vmatpush.msra.mxu0 0.0
    %922 = vmatpush.msra.mxu0 0.0
    %923 = vmatpush.msra.mxu0 0.0
    %v924 = vand.u32 %v781, 4294901760
    %925 = vmatpush.msra.mxu0 %v924
    %v926 = vand.u32 %v191, 4294901760
    %927 = vmatmul.f32.gmra.mxu0 %v926
    %v928 = vpop.f32.mrf.mxu0
    %v929 = vadd.f32 %v907, %v928
    %930 = vdwg.mxu0
    %931 = vmatpush.msra.mxu0 0.0
    %932 = vmatpush.msra.mxu0 0.0
    %933 = vmatpush.msra.mxu0 0.0
    %934 = vmatpush.msra.mxu0 0.0
    %935 = vmatpush.msra.mxu0 0.0
    %936 = vmatpush.msra.mxu0 0.0
    %937 = vmatpush.msra.mxu0 0.0
    %938 = vmatpush.msra.mxu0 0.0
    %939 = vmatpush.msra.mxu0 0.0
    %940 = vmatpush.msra.mxu0 0.0
    %941 = vmatpush.msra.mxu0 0.0
    %942 = vmatpush.msra.mxu0 0.0
    %943 = vmatpush.msra.mxu0 0.0
    %944 = vmatpush.msra.mxu0 0.0
    %945 = vmatpush.msra.mxu0 0.0
    %v946 = vand.u32 %v782, 4294901760
    %947 = vmatpush.msra.mxu0 %v946
    %v948 = vand.u32 %v191, 4294901760
    %v949 = vsub.f32 %v191, %v948
    %v950 = vand.u32 %v949, 4294901760
    %v951 = vsub.f32 %v949, %v950
    %v952 = vand.u32 %v951, 4294901760
    %953 = vmatmul.f32.gmra.mxu0 %v952
    %v954 = vpop.f32.mrf.mxu0
    %v955 = vadd.f32 1e-05, %v954
    %956 = vdwg.mxu0
    %957 = vmatpush.msra.mxu0 0.0
    %958 = vmatpush.msra.mxu0 0.0
    %959 = vmatpush.msra.mxu0 0.0
    %960 = vmatpush.msra.mxu0 0.0
    %961 = vmatpush.msra.mxu0 0.0
    %962 = vmatpush.msra.mxu0 0.0
    %963 = vmatpush.msra.mxu0 0.0
    %964 = vmatpush.msra.mxu0 0.0
    %965 = vmatpush.msra.mxu0 0.0
    %966 = vmatpush.msra.mxu0 0.0
    %967 = vmatpush.msra.mxu0 0.0
    %968 = vmatpush.msra.mxu0 0.0
    %969 = vmatpush.msra.mxu0 0.0
    %970 = vmatpush.msra.mxu0 0.0
    %971 = vmatpush.msra.mxu0 0.0
    %v972 = vand.u32 %v782, 4294901760
    %v973 = vsub.f32 %v782, %v972
    %v974 = vand.u32 %v973, 4294901760
    %v975 = vsub.f32 %v973, %v974
    %v976 = vand.u32 %v975, 4294901760
    %977 = vmatpush.msra.mxu0 %v976
    %v978 = vand.u32 %v191, 4294901760
    %979 = vmatmul.f32.gmra.mxu0 %v978
    %v980 = vpop.f32.mrf.mxu0
    %v981 = vadd.f32 %v955, %v980
    %982 = vdwg.mxu0
    %983 = vmatpush.msra.mxu0 0.0
    %984 = vmatpush.msra.mxu0 0.0
    %985 = vmatpush.msra.mxu0 0.0
    %986 = vmatpush.msra.mxu0 0.0
    %987 = vmatpush.msra.mxu0 0.0
    %988 = vmatpush.msra.mxu0 0.0
    %989 = vmatpush.msra.mxu0 0.0
    %990 = vmatpush.msra.mxu0 0.0
    %991 = vmatpush.msra.mxu0 0.0
    %992 = vmatpush.msra.mxu0 0.0
    %993 = vmatpush.msra.mxu0 0.0
    %994 = vmatpush.msra.mxu0 0.0
    %995 = vmatpush.msra.mxu0 0.0
    %996 = vmatpush.msra.mxu0 0.0
    %997 = vmatpush.msra.mxu0 0.0
    %v998 = vand.u32 %v782, 4294901760
    %v999 = vsub.f32 %v782, %v998
    %1000 = vmatpush.msra.mxu0 %v999
    %v1001 = vand.u32 %v191, 4294901760
    %v1002 = vsub.f32 %v191, %v1001
    %1003 = vmatmul.f32.gmra.mxu0 %v1002
    %v1004 = vpop.f32.mrf.mxu0
    %v1005 = vadd.f32 %v981, %v1004
    %1006 = vdwg.mxu0
    %1007 = vmatpush.msra.mxu0 0.0
    %1008 = vmatpush.msra.mxu0 0.0
    %1009 = vmatpush.msra.mxu0 0.0
    %1010 = vmatpush.msra.mxu0 0.0
    %1011 = vmatpush.msra.mxu0 0.0
    %1012 = vmatpush.msra.mxu0 0.0
    %1013 = vmatpush.msra.mxu0 0.0
    %1014 = vmatpush.msra.mxu0 0.0
    %1015 = vmatpush.msra.mxu0 0.0
    %1016 = vmatpush.msra.mxu0 0.0
    %1017 = vmatpush.msra.mxu0 0.0
    %1018 = vmatpush.msra.mxu0 0.0
    %1019 = vmatpush.msra.mxu0 0.0
    %1020 = vmatpush.msra.mxu0 0.0
    %1021 = vmatpush.msra.mxu0 0.0
    %v1022 = vand.u32 %v782, 4294901760
    %1023 = vmatpush.msra.mxu0 %v1022
    %v1024 = vand.u32 %v191, 4294901760
    %v1025 = vsub.f32 %v191, %v1024
    %v1026 = vand.u32 %v1025, 4294901760
    %1027 = vmatmul.f32.gmra.mxu0 %v1026
    %v1028 = vpop.f32.mrf.mxu0
    %v1029 = vadd.f32 %v1005, %v1028
    %1030 = vdwg.mxu0
    %1031 = vmatpush.msra.mxu0 0.0
    %1032 = vmatpush.msra.mxu0 0.0
    %1033 = vmatpush.msra.mxu0 0.0
    %1034 = vmatpush.msra.mxu0 0.0
    %1035 = vmatpush.msra.mxu0 0.0
    %1036 = vmatpush.msra.mxu0 0.0
    %1037 = vmatpush.msra.mxu0 0.0
    %1038 = vmatpush.msra.mxu0 0.0
    %1039 = vmatpush.msra.mxu0 0.0
    %1040 = vmatpush.msra.mxu0 0.0
    %1041 = vmatpush.msra.mxu0 0.0
    %1042 = vmatpush.msra.mxu0 0.0
    %1043 = vmatpush.msra.mxu0 0.0
    %1044 = vmatpush.msra.mxu0 0.0
    %1045 = vmatpush.msra.mxu0 0.0
    %v1046 = vand.u32 %v782, 4294901760
    %v1047 = vsub.f32 %v782, %v1046
    %v1048 = vand.u32 %v1047, 4294901760
    %1049 = vmatpush.msra.mxu0 %v1048
    %v1050 = vand.u32 %v191, 4294901760
    %1051 = vmatmul.f32.gmra.mxu0 %v1050
    %v1052 = vpop.f32.mrf.mxu0
    %v1053 = vadd.f32 %v1029, %v1052
    %1054 = vdwg.mxu0
    %1055 = vmatpush.msra.mxu0 0.0
    %1056 = vmatpush.msra.mxu0 0.0
    %1057 = vmatpush.msra.mxu0 0.0
    %1058 = vmatpush.msra.mxu0 0.0
    %1059 = vmatpush.msra.mxu0 0.0
    %1060 = vmatpush.msra.mxu0 0.0
    %1061 = vmatpush.msra.mxu0 0.0
    %1062 = vmatpush.msra.mxu0 0.0
    %1063 = vmatpush.msra.mxu0 0.0
    %1064 = vmatpush.msra.mxu0 0.0
    %1065 = vmatpush.msra.mxu0 0.0
    %1066 = vmatpush.msra.mxu0 0.0
    %1067 = vmatpush.msra.mxu0 0.0
    %1068 = vmatpush.msra.mxu0 0.0
    %1069 = vmatpush.msra.mxu0 0.0
    %v1070 = vand.u32 %v782, 4294901760
    %1071 = vmatpush.msra.mxu0 %v1070
    %v1072 = vand.u32 %v191, 4294901760
    %1073 = vmatmul.f32.gmra.mxu0 %v1072
    %v1074 = vpop.f32.mrf.mxu0
    %v1075 = vadd.f32 %v1053, %v1074
    %1076 = vdwg.mxu0
    %1077 = vmatpush.msra.mxu0 0.0
    %1078 = vmatpush.msra.mxu0 0.0
    %1079 = vmatpush.msra.mxu0 0.0
    %1080 = vmatpush.msra.mxu0 0.0
    %1081 = vmatpush.msra.mxu0 0.0
    %1082 = vmatpush.msra.mxu0 0.0
    %1083 = vmatpush.msra.mxu0 0.0
    %1084 = vmatpush.msra.mxu0 0.0
    %1085 = vmatpush.msra.mxu0 0.0
    %1086 = vmatpush.msra.mxu0 0.0
    %1087 = vmatpush.msra.mxu0 0.0
    %1088 = vmatpush.msra.mxu0 0.0
    %1089 = vmatpush.msra.mxu0 0.0
    %1090 = vmatpush.msra.mxu0 0.0
    %1091 = vmatpush.msra.mxu0 0.0
    %v1092 = vand.u32 %v783, 4294901760
    %1093 = vmatpush.msra.mxu0 %v1092
    %v1094 = vand.u32 %v191, 4294901760
    %v1095 = vsub.f32 %v191, %v1094
    %v1096 = vand.u32 %v1095, 4294901760
    %v1097 = vsub.f32 %v1095, %v1096
    %v1098 = vand.u32 %v1097, 4294901760
    %1099 = vmatmul.f32.gmra.mxu0 %v1098
    %v1100 = vpop.f32.mrf.mxu0
    %v1101 = vadd.f32 1e-05, %v1100
    %1102 = vdwg.mxu0
    %1103 = vmatpush.msra.mxu0 0.0
    %1104 = vmatpush.msra.mxu0 0.0
    %1105 = vmatpush.msra.mxu0 0.0
    %1106 = vmatpush.msra.mxu0 0.0
    %1107 = vmatpush.msra.mxu0 0.0
    %1108 = vmatpush.msra.mxu0 0.0
    %1109 = vmatpush.msra.mxu0 0.0
    %1110 = vmatpush.msra.mxu0 0.0
    %1111 = vmatpush.msra.mxu0 0.0
    %1112 = vmatpush.msra.mxu0 0.0
    %1113 = vmatpush.msra.mxu0 0.0
    %1114 = vmatpush.msra.mxu0 0.0
    %1115 = vmatpush.msra.mxu0 0.0
    %1116 = vmatpush.msra.mxu0 0.0
    %1117 = vmatpush.msra.mxu0 0.0
    %v1118 = vand.u32 %v783, 4294901760
    %v1119 = vsub.f32 %v783, %v1118
    %v1120 = vand.u32 %v1119, 4294901760
    %v1121 = vsub.f32 %v1119, %v1120
    %v1122 = vand.u32 %v1121, 4294901760
    %1123 = vmatpush.msra.mxu0 %v1122
    %v1124 = vand.u32 %v191, 4294901760
    %1125 = vmatmul.f32.gmra.mxu0 %v1124
    %v1126 = vpop.f32.mrf.mxu0
    %v1127 = vadd.f32 %v1101, %v1126
    %1128 = vdwg.mxu0
    %1129 = vmatpush.msra.mxu0 0.0
    %1130 = vmatpush.msra.mxu0 0.0
    %1131 = vmatpush.msra.mxu0 0.0
    %1132 = vmatpush.msra.mxu0 0.0
    %1133 = vmatpush.msra.mxu0 0.0
    %1134 = vmatpush.msra.mxu0 0.0
    %1135 = vmatpush.msra.mxu0 0.0
    %1136 = vmatpush.msra.mxu0 0.0
    %1137 = vmatpush.msra.mxu0 0.0
    %1138 = vmatpush.msra.mxu0 0.0
    %1139 = vmatpush.msra.mxu0 0.0
    %1140 = vmatpush.msra.mxu0 0.0
    %1141 = vmatpush.msra.mxu0 0.0
    %1142 = vmatpush.msra.mxu0 0.0
    %1143 = vmatpush.msra.mxu0 0.0
    %v1144 = vand.u32 %v783, 4294901760
    %v1145 = vsub.f32 %v783, %v1144
    %1146 = vmatpush.msra.mxu0 %v1145
    %v1147 = vand.u32 %v191, 4294901760
    %v1148 = vsub.f32 %v191, %v1147
    %1149 = vmatmul.f32.gmra.mxu0 %v1148
    %v1150 = vpop.f32.mrf.mxu0
    %v1151 = vadd.f32 %v1127, %v1150
    %1152 = vdwg.mxu0
    %1153 = vmatpush.msra.mxu0 0.0
    %1154 = vmatpush.msra.mxu0 0.0
    %1155 = vmatpush.msra.mxu0 0.0
    %1156 = vmatpush.msra.mxu0 0.0
    %1157 = vmatpush.msra.mxu0 0.0
    %1158 = vmatpush.msra.mxu0 0.0
    %1159 = vmatpush.msra.mxu0 0.0
    %1160 = vmatpush.msra.mxu0 0.0
    %1161 = vmatpush.msra.mxu0 0.0
    %1162 = vmatpush.msra.mxu0 0.0
    %1163 = vmatpush.msra.mxu0 0.0
    %1164 = vmatpush.msra.mxu0 0.0
    %1165 = vmatpush.msra.mxu0 0.0
    %1166 = vmatpush.msra.mxu0 0.0
    %1167 = vmatpush.msra.mxu0 0.0
    %v1168 = vand.u32 %v783, 4294901760
    %1169 = vmatpush.msra.mxu0 %v1168
    %v1170 = vand.u32 %v191, 4294901760
    %v1171 = vsub.f32 %v191, %v1170
    %v1172 = vand.u32 %v1171, 4294901760
    %1173 = vmatmul.f32.gmra.mxu0 %v1172
    %v1174 = vpop.f32.mrf.mxu0
    %v1175 = vadd.f32 %v1151, %v1174
    %1176 = vdwg.mxu0
    %1177 = vmatpush.msra.mxu0 0.0
    %1178 = vmatpush.msra.mxu0 0.0
    %1179 = vmatpush.msra.mxu0 0.0
    %1180 = vmatpush.msra.mxu0 0.0
    %1181 = vmatpush.msra.mxu0 0.0
    %1182 = vmatpush.msra.mxu0 0.0
    %1183 = vmatpush.msra.mxu0 0.0
    %1184 = vmatpush.msra.mxu0 0.0
    %1185 = vmatpush.msra.mxu0 0.0
    %1186 = vmatpush.msra.mxu0 0.0
    %1187 = vmatpush.msra.mxu0 0.0
    %1188 = vmatpush.msra.mxu0 0.0
    %1189 = vmatpush.msra.mxu0 0.0
    %1190 = vmatpush.msra.mxu0 0.0
    %1191 = vmatpush.msra.mxu0 0.0
    %v1192 = vand.u32 %v783, 4294901760
    %v1193 = vsub.f32 %v783, %v1192
    %v1194 = vand.u32 %v1193, 4294901760
    %1195 = vmatpush.msra.mxu0 %v1194
    %v1196 = vand.u32 %v191, 4294901760
    %1197 = vmatmul.f32.gmra.mxu0 %v1196
    %v1198 = vpop.f32.mrf.mxu0
    %v1199 = vadd.f32 %v1175, %v1198
    %1200 = vdwg.mxu0
    %1201 = vmatpush.msra.mxu0 0.0
    %1202 = vmatpush.msra.mxu0 0.0
    %1203 = vmatpush.msra.mxu0 0.0
    %1204 = vmatpush.msra.mxu0 0.0
    %1205 = vmatpush.msra.mxu0 0.0
    %1206 = vmatpush.msra.mxu0 0.0
    %1207 = vmatpush.msra.mxu0 0.0
    %1208 = vmatpush.msra.mxu0 0.0
    %1209 = vmatpush.msra.mxu0 0.0
    %1210 = vmatpush.msra.mxu0 0.0
    %1211 = vmatpush.msra.mxu0 0.0
    %1212 = vmatpush.msra.mxu0 0.0
    %1213 = vmatpush.msra.mxu0 0.0
    %1214 = vmatpush.msra.mxu0 0.0
    %1215 = vmatpush.msra.mxu0 0.0
    %v1216 = vand.u32 %v783, 4294901760
    %1217 = vmatpush.msra.mxu0 %v1216
    %v1218 = vand.u32 %v191, 4294901760
    %1219 = vmatmul.f32.gmra.mxu0 %v1218
    %v1220 = vpop.f32.mrf.mxu0
    %v1221 = vadd.f32 %v1199, %v1220
    %1222 = vdwg.mxu0
    %1223 = vmatpush.msra.mxu0 0.0
    %1224 = vmatpush.msra.mxu0 0.0
    %1225 = vmatpush.msra.mxu0 0.0
    %1226 = vmatpush.msra.mxu0 0.0
    %1227 = vmatpush.msra.mxu0 0.0
    %1228 = vmatpush.msra.mxu0 0.0
    %1229 = vmatpush.msra.mxu0 0.0
    %1230 = vmatpush.msra.mxu0 0.0
    %1231 = vmatpush.msra.mxu0 0.0
    %1232 = vmatpush.msra.mxu0 0.0
    %1233 = vmatpush.msra.mxu0 0.0
    %1234 = vmatpush.msra.mxu0 0.0
    %1235 = vmatpush.msra.mxu0 0.0
    %1236 = vmatpush.msra.mxu0 0.0
    %1237 = vmatpush.msra.mxu0 0.0
    %v1238 = vand.u32 %v784, 4294901760
    %1239 = vmatpush.msra.mxu0 %v1238
    %v1240 = vand.u32 %v191, 4294901760
    %v1241 = vsub.f32 %v191, %v1240
    %v1242 = vand.u32 %v1241, 4294901760
    %v1243 = vsub.f32 %v1241, %v1242
    %v1244 = vand.u32 %v1243, 4294901760
    %1245 = vmatmul.f32.gmra.mxu0 %v1244
    %v1246 = vpop.f32.mrf.mxu0
    %v1247 = vadd.f32 1e-05, %v1246
    %1248 = vdwg.mxu0
    %1249 = vmatpush.msra.mxu0 0.0
    %1250 = vmatpush.msra.mxu0 0.0
    %1251 = vmatpush.msra.mxu0 0.0
    %1252 = vmatpush.msra.mxu0 0.0
    %1253 = vmatpush.msra.mxu0 0.0
    %1254 = vmatpush.msra.mxu0 0.0
    %1255 = vmatpush.msra.mxu0 0.0
    %1256 = vmatpush.msra.mxu0 0.0
    %1257 = vmatpush.msra.mxu0 0.0
    %1258 = vmatpush.msra.mxu0 0.0
    %1259 = vmatpush.msra.mxu0 0.0
    %1260 = vmatpush.msra.mxu0 0.0
    %1261 = vmatpush.msra.mxu0 0.0
    %1262 = vmatpush.msra.mxu0 0.0
    %1263 = vmatpush.msra.mxu0 0.0
    %v1264 = vand.u32 %v784, 4294901760
    %v1265 = vsub.f32 %v784, %v1264
    %v1266 = vand.u32 %v1265, 4294901760
    %v1267 = vsub.f32 %v1265, %v1266
    %v1268 = vand.u32 %v1267, 4294901760
    %1269 = vmatpush.msra.mxu0 %v1268
    %v1270 = vand.u32 %v191, 4294901760
    %1271 = vmatmul.f32.gmra.mxu0 %v1270
    %v1272 = vpop.f32.mrf.mxu0
    %v1273 = vadd.f32 %v1247, %v1272
    %1274 = vdwg.mxu0
    %1275 = vmatpush.msra.mxu0 0.0
    %1276 = vmatpush.msra.mxu0 0.0
    %1277 = vmatpush.msra.mxu0 0.0
    %1278 = vmatpush.msra.mxu0 0.0
    %1279 = vmatpush.msra.mxu0 0.0
    %1280 = vmatpush.msra.mxu0 0.0
    %1281 = vmatpush.msra.mxu0 0.0
    %1282 = vmatpush.msra.mxu0 0.0
    %1283 = vmatpush.msra.mxu0 0.0
    %1284 = vmatpush.msra.mxu0 0.0
    %1285 = vmatpush.msra.mxu0 0.0
    %1286 = vmatpush.msra.mxu0 0.0
    %1287 = vmatpush.msra.mxu0 0.0
    %1288 = vmatpush.msra.mxu0 0.0
    %1289 = vmatpush.msra.mxu0 0.0
    %v1290 = vand.u32 %v784, 4294901760
    %v1291 = vsub.f32 %v784, %v1290
    %1292 = vmatpush.msra.mxu0 %v1291
    %v1293 = vand.u32 %v191, 4294901760
    %v1294 = vsub.f32 %v191, %v1293
    %1295 = vmatmul.f32.gmra.mxu0 %v1294
    %v1296 = vpop.f32.mrf.mxu0
    %v1297 = vadd.f32 %v1273, %v1296
    %1298 = vdwg.mxu0
    %1299 = vmatpush.msra.mxu0 0.0
    %1300 = vmatpush.msra.mxu0 0.0
    %1301 = vmatpush.msra.mxu0 0.0
    %1302 = vmatpush.msra.mxu0 0.0
    %1303 = vmatpush.msra.mxu0 0.0
    %1304 = vmatpush.msra.mxu0 0.0
    %1305 = vmatpush.msra.mxu0 0.0
    %1306 = vmatpush.msra.mxu0 0.0
    %1307 = vmatpush.msra.mxu0 0.0
    %1308 = vmatpush.msra.mxu0 0.0
    %1309 = vmatpush.msra.mxu0 0.0
    %1310 = vmatpush.msra.mxu0 0.0
    %1311 = vmatpush.msra.mxu0 0.0
    %1312 = vmatpush.msra.mxu0 0.0
    %1313 = vmatpush.msra.mxu0 0.0
    %v1314 = vand.u32 %v784, 4294901760
    %1315 = vmatpush.msra.mxu0 %v1314
    %v1316 = vand.u32 %v191, 4294901760
    %v1317 = vsub.f32 %v191, %v1316
    %v1318 = vand.u32 %v1317, 4294901760
    %1319 = vmatmul.f32.gmra.mxu0 %v1318
    %v1320 = vpop.f32.mrf.mxu0
    %v1321 = vadd.f32 %v1297, %v1320
    %1322 = vdwg.mxu0
    %1323 = vmatpush.msra.mxu0 0.0
    %1324 = vmatpush.msra.mxu0 0.0
    %1325 = vmatpush.msra.mxu0 0.0
    %1326 = vmatpush.msra.mxu0 0.0
    %1327 = vmatpush.msra.mxu0 0.0
    %1328 = vmatpush.msra.mxu0 0.0
    %1329 = vmatpush.msra.mxu0 0.0
    %1330 = vmatpush.msra.mxu0 0.0
    %1331 = vmatpush.msra.mxu0 0.0
    %1332 = vmatpush.msra.mxu0 0.0
    %1333 = vmatpush.msra.mxu0 0.0
    %1334 = vmatpush.msra.mxu0 0.0
    %1335 = vmatpush.msra.mxu0 0.0
    %1336 = vmatpush.msra.mxu0 0.0
    %1337 = vmatpush.msra.mxu0 0.0
    %v1338 = vand.u32 %v784, 4294901760
    %v1339 = vsub.f32 %v784, %v1338
    %v1340 = vand.u32 %v1339, 4294901760
    %1341 = vmatpush.msra.mxu0 %v1340
    %v1342 = vand.u32 %v191, 4294901760
    %1343 = vmatmul.f32.gmra.mxu0 %v1342
    %v1344 = vpop.f32.mrf.mxu0
    %v1345 = vadd.f32 %v1321, %v1344
    %1346 = vdwg.mxu0
    %1347 = vmatpush.msra.mxu0 0.0
    %1348 = vmatpush.msra.mxu0 0.0
    %1349 = vmatpush.msra.mxu0 0.0
    %1350 = vmatpush.msra.mxu0 0.0
    %1351 = vmatpush.msra.mxu0 0.0
    %1352 = vmatpush.msra.mxu0 0.0
    %1353 = vmatpush.msra.mxu0 0.0
    %1354 = vmatpush.msra.mxu0 0.0
    %1355 = vmatpush.msra.mxu0 0.0
    %1356 = vmatpush.msra.mxu0 0.0
    %1357 = vmatpush.msra.mxu0 0.0
    %1358 = vmatpush.msra.mxu0 0.0
    %1359 = vmatpush.msra.mxu0 0.0
    %1360 = vmatpush.msra.mxu0 0.0
    %1361 = vmatpush.msra.mxu0 0.0
    %v1362 = vand.u32 %v784, 4294901760
    %1363 = vmatpush.msra.mxu0 %v1362
    %v1364 = vand.u32 %v191, 4294901760
    %1365 = vmatmul.f32.gmra.mxu0 %v1364
    %v1366 = vpop.f32.mrf.mxu0
    %v1367 = vadd.f32 %v1345, %v1366
    %1368 = vdwg.mxu0
    %v1369 = vrsqrt.pop %v929
    %v1370 = vmul.f32 %v1369, %v929
    %v1371 = vmul.f32 %v1370, %v1369
    %v1372 = vmul.f32 0.5, %v1371
    %v1373 = vsub.f32 1.5, %v1372
    %v1374 = vmul.f32 %v1369, %v1373
    %vm1375 = vweird.f32 %v929
    %vm1376 = vweird.f32 %v1369
    %vm1377 = vmor %vm1375, %vm1376
    %v1378 = vsel %vm1377, %v1369, %v1374
    %v1379 = vrsqrt.pop %v1075
    %v1380 = vmul.f32 %v1379, %v1075
    %v1381 = vmul.f32 %v1380, %v1379
    %v1382 = vmul.f32 0.5, %v1381
    %v1383 = vsub.f32 1.5, %v1382
    %v1384 = vmul.f32 %v1379, %v1383
    %vm1385 = vweird.f32 %v1075
    %vm1386 = vweird.f32 %v1379
    %vm1387 = vmor %vm1385, %vm1386
    %v1388 = vsel %vm1387, %v1379, %v1384
    %v1389 = vrsqrt.pop %v1221
    %v1390 = vmul.f32 %v1389, %v1221
    %v1391 = vmul.f32 %v1390, %v1389
    %v1392 = vmul.f32 0.5, %v1391
    %v1393 = vsub.f32 1.5, %v1392
    %v1394 = vmul.f32 %v1389, %v1393
    %vm1395 = vweird.f32 %v1221
    %vm1396 = vweird.f32 %v1389
    %vm1397 = vmor %vm1395, %vm1396
    %v1398 = vsel %vm1397, %v1389, %v1394
    %v1399 = vrsqrt.pop %v1367
    %v1400 = vmul.f32 %v1399, %v1367
    %v1401 = vmul.f32 %v1400, %v1399
    %v1402 = vmul.f32 0.5, %v1401
    %v1403 = vsub.f32 1.5, %v1402
    %v1404 = vmul.f32 %v1399, %v1403
    %vm1405 = vweird.f32 %v1367
    %vm1406 = vweird.f32 %v1399
    %vm1407 = vmor %vm1405, %vm1406
    %v1408 = vsel %vm1407, %v1399, %v1404
    %v1410 = vperm.slane %v70, 0
    %v1411 = vperm.slane %v70, 1
    %v1412 = vperm.slane %v70, 2
    %v1413 = vperm.slane %v70, 3
    %v1418 = vmul.f32 %v1378, %v1410
    %v1419 = vmul.f32 %v1388, %v1411
    %v1420 = vmul.f32 %v1398, %v1412
    %v1421 = vmul.f32 %v1408, %v1413
    %v1422 = vmul.f32 %v777, %v1418
    %v1423 = vmul.f32 %v778, %v1419
    %v1424 = vadd.f32 %v1422, %v1423
    %v1425 = vmul.f32 %v779, %v1420
    %v1426 = vadd.f32 %v1424, %v1425
    %v1427 = vmul.f32 %v780, %v1421
    %v1428 = vadd.f32 %v1426, %v1427
    %v1429 = vld [vmem:[#allocation2] sm:$0xff]
    %v1430 = vadd.f32 %v1429, %v1428
    %1431 = vst [vmem:[#allocation2] sm:$0xff] %v1430
    // Predicated region
    $region34: #{tpu_custom_call.1} parent=1 // pred_check
      %p1432 = pneg %p63
    $region35: #{tpu_custom_call.1} parent=1 // pred_check_branch
      %1434 = sbr.rel (%p1432) target = $region37
    $region36: #{tpu_custom_call.1} parent=1 // pred_region
      %v1435 = vld [vmem:[#allocation2] sm:$0xff]
      %1436 = vadd.xlane.f32.xlu0 %v1435
      %v1437 = vpop.xlane.xlu0 %1436
      %v1438 = vld [vmem:[#allocation3] sm:$0x1]
      %v1440 = vperm.slane %v1438, 0
      %v1442 = vadd.f32 %v1437, %v1440
      %v1443 = vmax.f32 %v1442, 0.0
      %vm1444 = vcmask 7168
      %1445 = vst.msk [vmem:[%s4] sm:$0xff] %vm1444, %v1443
    $region37: #{tpu_custom_call.1} parent=1 // pred_fallthru
      _
    // Predicated region
    $region38: #{tpu_custom_call.1} parent=1 // pred_check
      _
    $region39: #{tpu_custom_call.1} parent=1 // pred_check_branch
      %1447 = sbr.rel (0) target = $region41
    $region40: #{tpu_custom_call.1} parent=1 // pred_region
      _
    $region41: #{tpu_custom_call.1} parent=1 // pred_fallthru
      _
    // Predicated region
    $region42: #{tpu_custom_call.1} parent=1 // pred_check
      _
    $region43: #{tpu_custom_call.1} parent=1 // pred_check_branch
      %1449 = sbr.rel (0) target = $region45
    $region44: #{tpu_custom_call.1} parent=1 // pred_region
      _
    $region45: #{tpu_custom_call.1} parent=1 // pred_fallthru
      _
    %1450 = vsyncpa [#allocation5], 1
    %1451 = vsyncpa [#allocation7], 1

</llo_original>
